<compile_context>
chip_gen: v7x
topology: tpu7x:2x2x1
jax: 0.10.0
libtpu: 0.0.40
codegen_flags: <defaults>
</compile_context>

<pallas_src>
import functools

import jax
import jax.numpy as jnp
from jax import lax
from jax.experimental import pallas as pl
from jax.experimental.pallas import tpu as pltpu

NEG_SLOPE = 0.2  # LeakyReLU(0.2) used by LapSRN ConvBlock/DeconvBlock 'lrelu'


def _lrelu(x):
    return jnp.where(x >= 0, x, NEG_SLOPE * x)


# ----------------------------------------------------------------------------
# Fused Pallas kernel: NB images (stacked as rows) per grid step.
#   x_ref        : (M, WC)        M = NB*H stacked image rows, lane-dense (w,c)
#   conv_a_ref   : (D, 3*WC, WC)  bf16 banded conv weights, taps merged along K
#   conv_b_ref   : (D, 1, WC)     f32 conv biases tiled over W
#   dec_even_ref : (2*WC, 2*WC)   bf16 deconv polyphase weights, even out rows
#   dec_odd_ref  : (WC, 2*WC)     bf16 deconv polyphase weights, odd out rows
#   dec_bias_ref : (1, 2*WC)      f32 deconv bias tiled over 2W
#   o_ref        : (2, M, 2*WC)   [row parity, stacked row, (mx,px,c)] output
#   res_ref      : (M, WC)        f32 VMEM scratch holding the residual
# ----------------------------------------------------------------------------
def _feature_embedding_kernel(x_ref, conv_a_ref, conv_b_ref, dec_even_ref,
                              dec_odd_ref, dec_bias_ref, o_ref, res_ref,
                              *, D, R, skip, H):
    M, WC = x_ref.shape

    # Per-image row-boundary masks for the +-1 row shifts (implicit zero pad).
    local = lax.broadcasted_iota(jnp.int32, (M, 1), 0) % H
    m_first = (local != 0).astype(jnp.float32)      # zero "row my-1" when my == 0
    m_last = (local != H - 1).astype(jnp.float32)   # zero "row my+1" when my == H-1

    act = x_ref[...].astype(jnp.float32)            # (M, WC), stays resident

    def conv_layer(a, d):
        # ConvBlock order='ac': LeakyReLU BEFORE the conv (f32 on the VPU).
        xc = _lrelu(a)
        up = pltpu.roll(xc, shift=1, axis=0) * m_first       # input row my-1 (XLU)
        dn = pltpu.roll(xc, shift=M - 1, axis=0) * m_last    # input row my+1 (XLU)
        # Single K=3*WC bf16 matmul per layer (merged vertical taps), f32 acc.
        lhs = jnp.concatenate([up, xc, dn], axis=1).astype(jnp.bfloat16)
        acc = jnp.dot(lhs, conv_a_ref[d], preferred_element_type=jnp.float32)
        return acc + conv_b_ref[d]

    for r in range(R):
        if skip == 'DS' or (skip == 'SS' and r == 0):
            res_ref[...] = act                      # park residual in VMEM
        for d in range(D):
            act = conv_layer(act, d)
        if skip in ('DS', 'SS'):
            act = act + res_ref[...]

    # DeconvBlock (lrelu -> ConvTranspose2d k=3 s=2 p=0) + crop of the last
    # row/column, via polyphase band matmuls on the undilated activation.
    xa = _lrelu(act)
    x_up = pltpu.roll(xa, shift=1, axis=0) * m_first          # input row my-1
    bias = dec_bias_ref[...]                                  # (1, 2*WC)
    lhs_e = jnp.concatenate([xa, x_up], axis=1).astype(jnp.bfloat16)
    ye = jnp.dot(lhs_e, dec_even_ref[...],
                 preferred_element_type=jnp.float32) + bias   # rows 2*my
    yo = jnp.dot(xa.astype(jnp.bfloat16), dec_odd_ref[...],
                 preferred_element_type=jnp.float32) + bias   # rows 2*my + 1
    o_ref[0] = ye.astype(o_ref.dtype)
    o_ref[1] = yo.astype(o_ref.dtype)


# ----------------------------------------------------------------------------
# One-time weight preparation (band matrices, tiled biases, bf16 casts).
# ----------------------------------------------------------------------------
def prepare_params(params, config, W):
    C = config['num_filter']
    D = config['D']
    WC = W * C

    # Conv: A[ky*WC + p*C + ci, q*C + co] = w[ky, p-q+1, ci, co]
    # (block tri-diagonal per vertical tap, taps stacked along K).
    def conv_band(w_hwio):
        mats = []
        for ky in range(3):
            m = jnp.zeros((WC, WC), jnp.float32)
            for kx in range(3):
                sel = jnp.eye(W, k=-(kx - 1), dtype=jnp.float32)
                m = m + jnp.kron(sel, w_hwio[ky, kx].astype(jnp.float32))
            mats.append(m)
        return jnp.concatenate(mats, axis=0)                     # (3*WC, WC)

    conv_a = jnp.stack([conv_band(params['conv_w'][d])
                        for d in range(D)]).astype(jnp.bfloat16)  # (D, 3WC, WC)
    conv_b = jnp.stack([jnp.tile(params['conv_b'][d], W)
                        for d in range(D)]).astype(jnp.float32)[:, None, :]

    # Deconv polyphase selectors: output column block j = 2*mx + px.
    wt = params['deconv_w'].astype(jnp.float32)   # (Cin, Cout, kH, kW)
    idx = jnp.arange(W)
    S0 = jnp.zeros((W, 2 * W), jnp.float32).at[idx, 2 * idx].set(1.0)
    S1 = jnp.zeros((W, 2 * W), jnp.float32).at[idx, 2 * idx + 1].set(1.0)
    S2 = jnp.zeros((W, 2 * W), jnp.float32).at[idx[:-1], 2 * idx[:-1] + 2].set(1.0)

    def tap(ky, kx):
        return wt[:, :, ky, kx]                   # (Cin, Cout)

    # even output row 2*my:  ky=0 taps from row my, ky=2 taps from row my-1
    b_even_cur = (jnp.kron(S0, tap(0, 0)) + jnp.kron(S2, tap(0, 2))
                  + jnp.kron(S1, tap(0, 1)))
    b_even_up = (jnp.kron(S0, tap(2, 0)) + jnp.kron(S2, tap(2, 2))
                 + jnp.kron(S1, tap(2, 1)))
    # odd output row 2*my+1: ky=1 taps from row my
    b_odd_cur = (jnp.kron(S0, tap(1, 0)) + jnp.kron(S2, tap(1, 2))
                 + jnp.kron(S1, tap(1, 1)))
    dec_even = jnp.concatenate([b_even_cur, b_even_up],
                               axis=0).astype(jnp.bfloat16)      # (2WC, 2WC)
    dec_odd = b_odd_cur.astype(jnp.bfloat16)                     # (WC, 2WC)
    dec_bias = jnp.tile(params['deconv_b'], 2 * W).astype(jnp.float32)[None, :]

    return {'conv_a': conv_a, 'conv_b': conv_b, 'dec_even': dec_even,
            'dec_odd': dec_odd, 'dec_bias': dec_bias}


# ----------------------------------------------------------------------------
# FeatureEmbedding forward (public interface: NCHW, PyTorch convention).
# ----------------------------------------------------------------------------
def feature_embedding_forward(x_nchw, prepared, config, images_per_step=None):
    N, C, H, W = x_nchw.shape
    WC = W * C
    D, R = config['D'], config['R']

    # Fold batch into the matmul M dimension (target M ~ 128) while keeping
    # at least 2 grid steps so both v7x TensorCores get work.
    if images_per_step is None:
        images_per_step = max(1, min(pl.cdiv(N, 2), max(1, 128 // H)))
    nb = images_per_step
    G = pl.cdiv(N, nb)
    Np = G * nb
    M = nb * H

    # NCHW -> lane-dense stacked rows (N*H, W*C)
    x2d = jnp.transpose(x_nchw, (0, 2, 3, 1)).reshape(N, H, WC)
    if Np != N:
        x2d = jnp.pad(x2d, ((0, Np - N), (0, 0), (0, 0)))
    xrows = x2d.reshape(Np * H, WC)

    kernel = functools.partial(_feature_embedding_kernel, D=D, R=R,
                               skip=config['skip_connect'], H=H)

    conv_a = prepared['conv_a']
    conv_b = prepared['conv_b']
    dec_even = prepared['dec_even']
    dec_odd = prepared['dec_odd']
    dec_bias = prepared['dec_bias']

    flops = Np * H * (R * D * 2 * WC * 3 * WC
                      + 2 * (2 * WC) * (2 * WC) + 2 * WC * (2 * WC))
    bytes_accessed = (Np * H * WC * 4 + 2 * Np * H * 2 * WC * 4
                      + conv_a.size * 2 + conv_b.size * 4
                      + dec_even.size * 2 + dec_odd.size * 2 + dec_bias.size * 4)

    out = pl.pallas_call(
        kernel,
        out_shape=jax.ShapeDtypeStruct((2, Np * H, 2 * WC), jnp.float32),
        grid=(G,),
        in_specs=[
            pl.BlockSpec((M, WC), lambda i: (i, 0)),
            pl.BlockSpec((D, 3 * WC, WC), lambda i: (0, 0, 0)),
            pl.BlockSpec((D, 1, WC), lambda i: (0, 0, 0)),
            pl.BlockSpec((2 * WC, 2 * WC), lambda i: (0, 0)),
            pl.BlockSpec((WC, 2 * WC), lambda i: (0, 0)),
            pl.BlockSpec((1, 2 * WC), lambda i: (0, 0)),
        ],
        out_specs=pl.BlockSpec((2, M, 2 * WC), lambda i: (0, i, 0)),
        scratch_shapes=[pltpu.VMEM((M, WC), jnp.float32)],
        compiler_params=pltpu.CompilerParams(
            dimension_semantics=("parallel",),
            vmem_limit_bytes=32 * 1024 * 1024),
        cost_estimate=pl.CostEstimate(flops=int(flops), transcendentals=0,
                                      bytes_accessed=int(bytes_accessed)),
    )(xrows, conv_a, conv_b, dec_even, dec_odd, dec_bias)

    # out[py, n*H+my, mx*2C + px*C + c]  ->  NCHW (n, c, 2*my+py, 2*mx+px)
    out = out.reshape(2, Np, H, W, 2, C)[:, :N]
    out = jnp.transpose(out, (1, 5, 2, 0, 3, 4))
    return out.reshape(N, C, 2 * H, 2 * W)


# ----------------------------------------------------------------------------
# Pure-JAX (lax) reference for a numerical sanity check
# ----------------------------------------------------------------------------
def feature_embedding_reference(x_nchw, params, config):
    dn = ('NHWC', 'HWIO', 'NHWC')
    x = jnp.transpose(x_nchw, (0, 2, 3, 1))

    def conv_ref(t, w, b):
        return lax.conv_general_dilated(_lrelu(t), w, (1, 1), ((1, 1), (1, 1)),
                                        dimension_numbers=dn) + b

    def rec(t):
        for d in range(config['D']):
            t = conv_ref(t, params['conv_w'][d], params['conv_b'][d])
        return t

    level_input = x
    for i in range(config['R']):
        if config['skip_connect'] == 'DS':
            bi = x
            x = rec(x)
            x = bi + x
        elif config['skip_connect'] == 'SS':
            if i == 0:
                level_input = x
            x = rec(x)
            x = x + level_input
        else:
            x = rec(x)

    w_t = params['deconv_w']
    w_conv = jnp.transpose(w_t[:, :, ::-1, ::-1], (2, 3, 0, 1))
    y = lax.conv_general_dilated(_lrelu(x), w_conv, (1, 1), ((2, 2), (2, 2)),
                                 lhs_dilation=(2, 2), dimension_numbers=dn)
    y = y + params['deconv_b']
    y = y[:, :2 * x.shape[1], :2 * x.shape[2], :]
    return jnp.transpose(y, (0, 3, 1, 2))


if __name__ == "__main__":
    C = 8
    H = W = 16
    base_config = {'D': 2, 'R': 2, 'num_filter': C}

    key = jax.random.PRNGKey(0)
    keys = jax.random.split(key, 2 * base_config['D'] + 3)
    params = {
        'conv_w': [0.1 * jax.random.normal(keys[2 * d], (3, 3, C, C), jnp.float32)
                   for d in range(base_config['D'])],
        'conv_b': [0.01 * jax.random.normal(keys[2 * d + 1], (C,), jnp.float32)
                   for d in range(base_config['D'])],
        # PyTorch ConvTranspose2d weight layout: (C_in, C_out, kH, kW)
        'deconv_w': 0.1 * jax.random.normal(keys[-3], (C, C, 3, 3), jnp.float32),
        'deconv_b': 0.01 * jax.random.normal(keys[-2], (C,), jnp.float32),
    }
    x = jax.random.normal(keys[-1], (2, C, H, W), jnp.float32)  # NCHW

    prepared = prepare_params(params, base_config, W)

    # bf16 MXU operands vs. full-f32 reference across R*D stacked convs +
    # residuals + deconv: relaxed (but still meaningful) tolerance.
    TOL = 3e-2
    for skip in ('DS', 'SS', 'NS'):
        config = dict(base_config, skip_connect=skip)
        out = jax.block_until_ready(feature_embedding_forward(x, prepared, config))
        ref = jax.block_until_ready(feature_embedding_reference(x, params, config))
        assert out.shape == (2, C, 2 * H, 2 * W), f"unexpected output shape {out.shape}"
        err = float(jnp.max(jnp.abs(out - ref)))
        if err > TOL:
            raise AssertionError(
                f"[{skip}] kernel vs reference mismatch, max abs err = {err}")

    # Exercise the batch-folded path (NB images per grid step, M = NB*H).
    x8 = jax.random.normal(jax.random.PRNGKey(1), (8, C, H, W), jnp.float32)
    config = dict(base_config, skip_connect='DS')
    out8 = jax.block_until_ready(feature_embedding_forward(x8, prepared, config))
    ref8 = jax.block_until_ready(feature_embedding_reference(x8, params, config))
    err8 = float(jnp.max(jnp.abs(out8 - ref8)))
    if err8 > TOL:
        raise AssertionError(f"[DS/batched] mismatch, max abs err = {err8}")

    print("KERNEL_OK")
</pallas_src>

<mosaic_0001>
module attributes {stable_mosaic.version = 11 : i64} {
  func.func @_feature_embedding_kernel(%arg0: i32, %arg1: memref<16x128xf32, #tpu.memory_space<vmem>>, %arg2: memref<2x384x128xbf16, #tpu.memory_space<vmem>>, %arg3: memref<2x1x128xf32, #tpu.memory_space<vmem>>, %arg4: memref<256x256xbf16, #tpu.memory_space<vmem>>, %arg5: memref<128x256xbf16, #tpu.memory_space<vmem>>, %arg6: memref<1x256xf32, #tpu.memory_space<vmem>>, %arg7: memref<2x16x256xf32, #tpu.memory_space<vmem>>, %arg8: memref<16x128xf32, #tpu.memory_space<vmem>>) attributes {dimension_semantics = [#tpu.dimension_semantics<parallel>], iteration_bounds = array<i64: 2>, scalar_prefetch = 0 : i64, scratch_operands = 1 : i64, tpu.core_type = #tpu.core_type<tc>, window_params = [{transform_indices = @transform_0, window_bounds = array<i64: 16, 128>}, {pipeline_mode = #tpu.pipeline_mode<synchronous>, transform_indices = @transform_1, window_bounds = array<i64: 2, 384, 128>}, {pipeline_mode = #tpu.pipeline_mode<synchronous>, transform_indices = @transform_2, window_bounds = array<i64: 2, 1, 128>}, {pipeline_mode = #tpu.pipeline_mode<synchronous>, transform_indices = @transform_3, window_bounds = array<i64: 256, 256>}, {pipeline_mode = #tpu.pipeline_mode<synchronous>, transform_indices = @transform_4, window_bounds = array<i64: 128, 256>}, {pipeline_mode = #tpu.pipeline_mode<synchronous>, transform_indices = @transform_5, window_bounds = array<i64: 1, 256>}, {transform_indices = @transform_6, window_bounds = array<i64: 2, 16, 256>}]} {
    %0 = tpu.iota {dimensions = array<i32: 0>} : vector<16x1xi32>
    %c16_i32 = arith.constant 16 : i32
    %c0_i32 = arith.constant 0 : i32
    %1 = arith.cmpi eq, %c16_i32, %c0_i32 : i32
    %c1_i32 = arith.constant 1 : i32
    %2 = arith.select %1, %c1_i32, %c16_i32 : i32
    %3 = vector.broadcast %2 : i32 to vector<16x1xi32>
    %4 = arith.remsi %0, %3 : vector<16x1xi32>
    %c0_i32_0 = arith.constant 0 : i32
    %5 = vector.broadcast %c0_i32_0 : i32 to vector<16x1xi32>
    %6 = arith.cmpi ne, %4, %5 : vector<16x1xi32>
    %c0_i32_1 = arith.constant 0 : i32
    %7 = vector.broadcast %c0_i32_1 : i32 to vector<16x1xi32>
    %8 = arith.cmpi slt, %4, %7 : vector<16x1xi32>
    %c0_i32_2 = arith.constant 0 : i32
    %9 = arith.cmpi slt, %2, %c0_i32_2 : i32
    %10 = vector.broadcast %9 : i1 to vector<16x1xi1>
    %11 = vector.broadcast %10 : vector<16x1xi1> to vector<16x1xi1>
    %12 = arith.xori %8, %11 : vector<16x1xi1>
    %13 = arith.andi %12, %6 : vector<16x1xi1>
    %14 = vector.broadcast %2 : i32 to vector<16x1xi32>
    %15 = arith.addi %4, %14 : vector<16x1xi32>
    %16 = arith.select %13, %15, %4 : vector<16x1xi1>, vector<16x1xi32>
    %c0_i32_3 = arith.constant 0 : i32
    %17 = vector.broadcast %c0_i32_3 : i32 to vector<16x1xi32>
    %18 = arith.cmpi ne, %16, %17 : vector<16x1xi32>
    %19 = arith.extui %18 : vector<16x1xi1> to vector<16x1xi32>
    %20 = arith.sitofp %19 : vector<16x1xi32> to vector<16x1xf32>
    %c15_i32 = arith.constant 15 : i32
    %21 = vector.broadcast %c15_i32 : i32 to vector<16x1xi32>
    %22 = arith.cmpi ne, %16, %21 : vector<16x1xi32>
    %23 = arith.extui %22 : vector<16x1xi1> to vector<16x1xi32>
    %24 = arith.sitofp %23 : vector<16x1xi32> to vector<16x1xf32>
    %c0 = arith.constant 0 : index
    %c0_4 = arith.constant 0 : index
    %25 = vector.load %arg1[%c0, %c0_4] : memref<16x128xf32, #tpu.memory_space<vmem>>, vector<16x128xf32>
    %c0_5 = arith.constant 0 : index
    %c0_6 = arith.constant 0 : index
    %26 = vector.load %arg8[%c0_5, %c0_6] : memref<16x128xf32, #tpu.memory_space<vmem>>, vector<16x128xf32>
    tpu.vector_store %arg8[%c0_5, %c0_6], %25 {strides = array<i32>} : memref<16x128xf32, #tpu.memory_space<vmem>>, vector<16x128xf32>,
    %cst = arith.constant 0.000000e+00 : f32
    %27 = vector.broadcast %cst : f32 to vector<16x128xf32>
    %28 = arith.cmpf oge, %25, %27 : vector<16x128xf32>
    %cst_7 = arith.constant 2.000000e-01 : f32
    %29 = vector.broadcast %cst_7 : f32 to vector<16x128xf32>
    %30 = arith.mulf %29, %25 : vector<16x128xf32>
    %31 = arith.select %28, %25, %30 : vector<16x128xi1>, vector<16x128xf32>
    %c1_i32_8 = arith.constant 1 : i32
    %32 = tpu.dynamic_rotate %31 by %c1_i32_8 dim 0 : vector<16x128xf32>, i32 -> vector<16x128xf32>
    %33 = vector.broadcast %20 : vector<16x1xf32> to vector<16x128xf32>
    %34 = arith.mulf %32, %33 : vector<16x128xf32>
    %c15_i32_9 = arith.constant 15 : i32
    %35 = tpu.dynamic_rotate %31 by %c15_i32_9 dim 0 : vector<16x128xf32>, i32 -> vector<16x128xf32>
    %36 = vector.broadcast %24 : vector<16x1xf32> to vector<16x128xf32>
    %37 = arith.mulf %35, %36 : vector<16x128xf32>
    %38 = tpu.concatenate %34, %31, %37 in 1 : vector<16x128xf32>, vector<16x128xf32>, vector<16x128xf32> -> vector<16x384xf32>
    %39 = arith.truncf %38 : vector<16x384xf32> to vector<16x384xbf16>
    %c0_10 = arith.constant 0 : index
    %c0_11 = arith.constant 0 : index
    %c0_12 = arith.constant 0 : index
    %40 = vector.load %arg2[%c0_10, %c0_11, %c0_12] : memref<2x384x128xbf16, #tpu.memory_space<vmem>>, vector<1x384x128xbf16>
    %41 = vector.shape_cast %40 : vector<1x384x128xbf16> to vector<384x128xbf16>
    %cst_13 = arith.constant dense<0.000000e+00> : vector<16x128xf32>
    %42 = tpu.matmul %39, %41, %cst_13 {dimension_numbers = #tpu.dot_dimension_numbers<[1], [0], [0], [1], [0, 0, 1, 1], [], []>} : vector<16x384xbf16>, vector<384x128xbf16>, vector<16x128xf32> -> vector<16x128xf32>
    %c0_14 = arith.constant 0 : index
    %c0_15 = arith.constant 0 : index
    %c0_16 = arith.constant 0 : index
    %43 = vector.load %arg3[%c0_14, %c0_15, %c0_16] : memref<2x1x128xf32, #tpu.memory_space<vmem>>, vector<1x1x128xf32>
    %44 = vector.shape_cast %43 : vector<1x1x128xf32> to vector<1x128xf32>
    %45 = vector.broadcast %44 : vector<1x128xf32> to vector<16x128xf32>
    %46 = arith.addf %42, %45 : vector<16x128xf32>
    %cst_17 = arith.constant 0.000000e+00 : f32
    %47 = vector.broadcast %cst_17 : f32 to vector<16x128xf32>
    %48 = arith.cmpf oge, %46, %47 : vector<16x128xf32>
    %cst_18 = arith.constant 2.000000e-01 : f32
    %49 = vector.broadcast %cst_18 : f32 to vector<16x128xf32>
    %50 = arith.mulf %49, %46 : vector<16x128xf32>
    %51 = arith.select %48, %46, %50 : vector<16x128xi1>, vector<16x128xf32>
    %c1_i32_19 = arith.constant 1 : i32
    %52 = tpu.dynamic_rotate %51 by %c1_i32_19 dim 0 : vector<16x128xf32>, i32 -> vector<16x128xf32>
    %53 = vector.broadcast %20 : vector<16x1xf32> to vector<16x128xf32>
    %54 = arith.mulf %52, %53 : vector<16x128xf32>
    %c15_i32_20 = arith.constant 15 : i32
    %55 = tpu.dynamic_rotate %51 by %c15_i32_20 dim 0 : vector<16x128xf32>, i32 -> vector<16x128xf32>
    %56 = vector.broadcast %24 : vector<16x1xf32> to vector<16x128xf32>
    %57 = arith.mulf %55, %56 : vector<16x128xf32>
    %58 = tpu.concatenate %54, %51, %57 in 1 : vector<16x128xf32>, vector<16x128xf32>, vector<16x128xf32> -> vector<16x384xf32>
    %59 = arith.truncf %58 : vector<16x384xf32> to vector<16x384xbf16>
    %c1 = arith.constant 1 : index
    %c0_21 = arith.constant 0 : index
    %c0_22 = arith.constant 0 : index
    %60 = vector.load %arg2[%c1, %c0_21, %c0_22] : memref<2x384x128xbf16, #tpu.memory_space<vmem>>, vector<1x384x128xbf16>
    %61 = vector.shape_cast %60 : vector<1x384x128xbf16> to vector<384x128xbf16>
    %cst_23 = arith.constant dense<0.000000e+00> : vector<16x128xf32>
    %62 = tpu.matmul %59, %61, %cst_23 {dimension_numbers = #tpu.dot_dimension_numbers<[1], [0], [0], [1], [0, 0, 1, 1], [], []>} : vector<16x384xbf16>, vector<384x128xbf16>, vector<16x128xf32> -> vector<16x128xf32>
    %c1_24 = arith.constant 1 : index
    %c0_25 = arith.constant 0 : index
    %c0_26 = arith.constant 0 : index
    %63 = vector.load %arg3[%c1_24, %c0_25, %c0_26] : memref<2x1x128xf32, #tpu.memory_space<vmem>>, vector<1x1x128xf32>
    %64 = vector.shape_cast %63 : vector<1x1x128xf32> to vector<1x128xf32>
    %65 = vector.broadcast %64 : vector<1x128xf32> to vector<16x128xf32>
    %66 = arith.addf %62, %65 : vector<16x128xf32>
    %c0_27 = arith.constant 0 : index
    %c0_28 = arith.constant 0 : index
    %67 = vector.load %arg8[%c0_27, %c0_28] : memref<16x128xf32, #tpu.memory_space<vmem>>, vector<16x128xf32>
    %68 = arith.addf %66, %67 : vector<16x128xf32>
    %c0_29 = arith.constant 0 : index
    %c0_30 = arith.constant 0 : index
    %69 = vector.load %arg8[%c0_29, %c0_30] : memref<16x128xf32, #tpu.memory_space<vmem>>, vector<16x128xf32>
    tpu.vector_store %arg8[%c0_29, %c0_30], %68 {strides = array<i32>} : memref<16x128xf32, #tpu.memory_space<vmem>>, vector<16x128xf32>,
    %cst_31 = arith.constant 0.000000e+00 : f32
    %70 = vector.broadcast %cst_31 : f32 to vector<16x128xf32>
    %71 = arith.cmpf oge, %68, %70 : vector<16x128xf32>
    %cst_32 = arith.constant 2.000000e-01 : f32
    %72 = vector.broadcast %cst_32 : f32 to vector<16x128xf32>
    %73 = arith.mulf %72, %68 : vector<16x128xf32>
    %74 = arith.select %71, %68, %73 : vector<16x128xi1>, vector<16x128xf32>
    %c1_i32_33 = arith.constant 1 : i32
    %75 = tpu.dynamic_rotate %74 by %c1_i32_33 dim 0 : vector<16x128xf32>, i32 -> vector<16x128xf32>
    %76 = vector.broadcast %20 : vector<16x1xf32> to vector<16x128xf32>
    %77 = arith.mulf %75, %76 : vector<16x128xf32>
    %c15_i32_34 = arith.constant 15 : i32
    %78 = tpu.dynamic_rotate %74 by %c15_i32_34 dim 0 : vector<16x128xf32>, i32 -> vector<16x128xf32>
    %79 = vector.broadcast %24 : vector<16x1xf32> to vector<16x128xf32>
    %80 = arith.mulf %78, %79 : vector<16x128xf32>
    %81 = tpu.concatenate %77, %74, %80 in 1 : vector<16x128xf32>, vector<16x128xf32>, vector<16x128xf32> -> vector<16x384xf32>
    %82 = arith.truncf %81 : vector<16x384xf32> to vector<16x384xbf16>
    %c0_35 = arith.constant 0 : index
    %c0_36 = arith.constant 0 : index
    %c0_37 = arith.constant 0 : index
    %83 = vector.load %arg2[%c0_35, %c0_36, %c0_37] : memref<2x384x128xbf16, #tpu.memory_space<vmem>>, vector<1x384x128xbf16>
    %84 = vector.shape_cast %83 : vector<1x384x128xbf16> to vector<384x128xbf16>
    %cst_38 = arith.constant dense<0.000000e+00> : vector<16x128xf32>
    %85 = tpu.matmul %82, %84, %cst_38 {dimension_numbers = #tpu.dot_dimension_numbers<[1], [0], [0], [1], [0, 0, 1, 1], [], []>} : vector<16x384xbf16>, vector<384x128xbf16>, vector<16x128xf32> -> vector<16x128xf32>
    %c0_39 = arith.constant 0 : index
    %c0_40 = arith.constant 0 : index
    %c0_41 = arith.constant 0 : index
    %86 = vector.load %arg3[%c0_39, %c0_40, %c0_41] : memref<2x1x128xf32, #tpu.memory_space<vmem>>, vector<1x1x128xf32>
    %87 = vector.shape_cast %86 : vector<1x1x128xf32> to vector<1x128xf32>
    %88 = vector.broadcast %87 : vector<1x128xf32> to vector<16x128xf32>
    %89 = arith.addf %85, %88 : vector<16x128xf32>
    %cst_42 = arith.constant 0.000000e+00 : f32
    %90 = vector.broadcast %cst_42 : f32 to vector<16x128xf32>
    %91 = arith.cmpf oge, %89, %90 : vector<16x128xf32>
    %cst_43 = arith.constant 2.000000e-01 : f32
    %92 = vector.broadcast %cst_43 : f32 to vector<16x128xf32>
    %93 = arith.mulf %92, %89 : vector<16x128xf32>
    %94 = arith.select %91, %89, %93 : vector<16x128xi1>, vector<16x128xf32>
    %c1_i32_44 = arith.constant 1 : i32
    %95 = tpu.dynamic_rotate %94 by %c1_i32_44 dim 0 : vector<16x128xf32>, i32 -> vector<16x128xf32>
    %96 = vector.broadcast %20 : vector<16x1xf32> to vector<16x128xf32>
    %97 = arith.mulf %95, %96 : vector<16x128xf32>
    %c15_i32_45 = arith.constant 15 : i32
    %98 = tpu.dynamic_rotate %94 by %c15_i32_45 dim 0 : vector<16x128xf32>, i32 -> vector<16x128xf32>
    %99 = vector.broadcast %24 : vector<16x1xf32> to vector<16x128xf32>
    %100 = arith.mulf %98, %99 : vector<16x128xf32>
    %101 = tpu.concatenate %97, %94, %100 in 1 : vector<16x128xf32>, vector<16x128xf32>, vector<16x128xf32> -> vector<16x384xf32>
    %102 = arith.truncf %101 : vector<16x384xf32> to vector<16x384xbf16>
    %c1_46 = arith.constant 1 : index
    %c0_47 = arith.constant 0 : index
    %c0_48 = arith.constant 0 : index
    %103 = vector.load %arg2[%c1_46, %c0_47, %c0_48] : memref<2x384x128xbf16, #tpu.memory_space<vmem>>, vector<1x384x128xbf16>
    %104 = vector.shape_cast %103 : vector<1x384x128xbf16> to vector<384x128xbf16>
    %cst_49 = arith.constant dense<0.000000e+00> : vector<16x128xf32>
    %105 = tpu.matmul %102, %104, %cst_49 {dimension_numbers = #tpu.dot_dimension_numbers<[1], [0], [0], [1], [0, 0, 1, 1], [], []>} : vector<16x384xbf16>, vector<384x128xbf16>, vector<16x128xf32> -> vector<16x128xf32>
    %c1_50 = arith.constant 1 : index
    %c0_51 = arith.constant 0 : index
    %c0_52 = arith.constant 0 : index
    %106 = vector.load %arg3[%c1_50, %c0_51, %c0_52] : memref<2x1x128xf32, #tpu.memory_space<vmem>>, vector<1x1x128xf32>
    %107 = vector.shape_cast %106 : vector<1x1x128xf32> to vector<1x128xf32>
    %108 = vector.broadcast %107 : vector<1x128xf32> to vector<16x128xf32>
    %109 = arith.addf %105, %108 : vector<16x128xf32>
    %c0_53 = arith.constant 0 : index
    %c0_54 = arith.constant 0 : index
    %110 = vector.load %arg8[%c0_53, %c0_54] : memref<16x128xf32, #tpu.memory_space<vmem>>, vector<16x128xf32>
    %111 = arith.addf %109, %110 : vector<16x128xf32>
    %cst_55 = arith.constant 0.000000e+00 : f32
    %112 = vector.broadcast %cst_55 : f32 to vector<16x128xf32>
    %113 = arith.cmpf oge, %111, %112 : vector<16x128xf32>
    %cst_56 = arith.constant 2.000000e-01 : f32
    %114 = vector.broadcast %cst_56 : f32 to vector<16x128xf32>
    %115 = arith.mulf %114, %111 : vector<16x128xf32>
    %116 = arith.select %113, %111, %115 : vector<16x128xi1>, vector<16x128xf32>
    %c1_i32_57 = arith.constant 1 : i32
    %117 = tpu.dynamic_rotate %116 by %c1_i32_57 dim 0 : vector<16x128xf32>, i32 -> vector<16x128xf32>
    %118 = vector.broadcast %20 : vector<16x1xf32> to vector<16x128xf32>
    %119 = arith.mulf %117, %118 : vector<16x128xf32>
    %c0_58 = arith.constant 0 : index
    %c0_59 = arith.constant 0 : index
    %120 = vector.load %arg6[%c0_58, %c0_59] : memref<1x256xf32, #tpu.memory_space<vmem>>, vector<1x256xf32>
    %121 = tpu.concatenate %116, %119 in 1 : vector<16x128xf32>, vector<16x128xf32> -> vector<16x256xf32>
    %122 = arith.truncf %121 : vector<16x256xf32> to vector<16x256xbf16>
    %c0_60 = arith.constant 0 : index
    %c0_61 = arith.constant 0 : index
    %123 = vector.load %arg4[%c0_60, %c0_61] : memref<256x256xbf16, #tpu.memory_space<vmem>>, vector<256x256xbf16>
    %cst_62 = arith.constant dense<0.000000e+00> : vector<16x256xf32>
    %124 = tpu.matmul %122, %123, %cst_62 {dimension_numbers = #tpu.dot_dimension_numbers<[1], [0], [0], [1], [0, 0, 1, 1], [], []>} : vector<16x256xbf16>, vector<256x256xbf16>, vector<16x256xf32> -> vector<16x256xf32>
    %125 = vector.broadcast %120 : vector<1x256xf32> to vector<16x256xf32>
    %126 = arith.addf %124, %125 : vector<16x256xf32>
    %127 = arith.truncf %116 : vector<16x128xf32> to vector<16x128xbf16>
    %c0_63 = arith.constant 0 : index
    %c0_64 = arith.constant 0 : index
    %128 = vector.load %arg5[%c0_63, %c0_64] : memref<128x256xbf16, #tpu.memory_space<vmem>>, vector<128x256xbf16>
    %cst_65 = arith.constant dense<0.000000e+00> : vector<16x256xf32>
    %129 = tpu.matmul %127, %128, %cst_65 {dimension_numbers = #tpu.dot_dimension_numbers<[1], [0], [0], [1], [0, 0, 1, 1], [], []>} : vector<16x128xbf16>, vector<128x256xbf16>, vector<16x256xf32> -> vector<16x256xf32>
    %130 = vector.broadcast %120 : vector<1x256xf32> to vector<16x256xf32>
    %131 = arith.addf %129, %130 : vector<16x256xf32>
    %c0_66 = arith.constant 0 : index
    %c0_67 = arith.constant 0 : index
    %c0_68 = arith.constant 0 : index
    %132 = vector.load %arg7[%c0_66, %c0_67, %c0_68] : memref<2x16x256xf32, #tpu.memory_space<vmem>>, vector<1x16x256xf32>
    %133 = vector.shape_cast %132 : vector<1x16x256xf32> to vector<16x256xf32>
    %134 = vector.shape_cast %126 : vector<16x256xf32> to vector<1x16x256xf32>
    tpu.vector_store %arg7[%c0_66, %c0_67, %c0_68], %134 {strides = array<i32>} : memref<2x16x256xf32, #tpu.memory_space<vmem>>, vector<1x16x256xf32>,
    %c1_69 = arith.constant 1 : index
    %c0_70 = arith.constant 0 : index
    %c0_71 = arith.constant 0 : index
    %135 = vector.load %arg7[%c1_69, %c0_70, %c0_71] : memref<2x16x256xf32, #tpu.memory_space<vmem>>, vector<1x16x256xf32>
    %136 = vector.shape_cast %135 : vector<1x16x256xf32> to vector<16x256xf32>
    %137 = vector.shape_cast %131 : vector<16x256xf32> to vector<1x16x256xf32>
    tpu.vector_store %arg7[%c1_69, %c0_70, %c0_71], %137 {strides = array<i32>} : memref<2x16x256xf32, #tpu.memory_space<vmem>>, vector<1x16x256xf32>,
    return
  }
  func.func @transform_0(%arg0: i32) -> (i32, i32) {
    %c0_i32 = arith.constant 0 : i32
    %c0_i32_0 = arith.constant 0 : i32
    return %arg0, %c0_i32 : i32, i32
  }
  func.func @transform_1(%arg0: i32) -> (i32, i32, i32) {
    %c0_i32 = arith.constant 0 : i32
    %c0_i32_0 = arith.constant 0 : i32
    %c0_i32_1 = arith.constant 0 : i32
    %c0_i32_2 = arith.constant 0 : i32
    return %c0_i32, %c0_i32_0, %c0_i32_1 : i32, i32, i32
  }
  func.func @transform_2(%arg0: i32) -> (i32, i32, i32) {
    %c0_i32 = arith.constant 0 : i32
    %c0_i32_0 = arith.constant 0 : i32
    %c0_i32_1 = arith.constant 0 : i32
    %c0_i32_2 = arith.constant 0 : i32
    return %c0_i32, %c0_i32_0, %c0_i32_1 : i32, i32, i32
  }
  func.func @transform_3(%arg0: i32) -> (i32, i32) {
    %c0_i32 = arith.constant 0 : i32
    %c0_i32_0 = arith.constant 0 : i32
    %c0_i32_1 = arith.constant 0 : i32
    return %c0_i32, %c0_i32_0 : i32, i32
  }
  func.func @transform_4(%arg0: i32) -> (i32, i32) {
    %c0_i32 = arith.constant 0 : i32
    %c0_i32_0 = arith.constant 0 : i32
    %c0_i32_1 = arith.constant 0 : i32
    return %c0_i32, %c0_i32_0 : i32, i32
  }
  func.func @transform_5(%arg0: i32) -> (i32, i32) {
    %c0_i32 = arith.constant 0 : i32
    %c0_i32_0 = arith.constant 0 : i32
    %c0_i32_1 = arith.constant 0 : i32
    return %c0_i32, %c0_i32_0 : i32, i32
  }
  func.func @transform_6(%arg0: i32) -> (i32, i32, i32) {
    %c0_i32 = arith.constant 0 : i32
    %c0_i32_0 = arith.constant 0 : i32
    %c0_i32_1 = arith.constant 0 : i32
    return %c0_i32, %arg0, %c0_i32_0 : i32, i32, i32
  }
}

</mosaic_0001>

<llo_original>
// kernel: tpu_custom_call.1
$region0: #{tpu_custom_call.1}
  #allocation0 [shape = 'u32[]', space=smem, size = 0x4, offset = 0x4, fixed_abs, tag = 'smem constant byte address 0x4 - core index']
  #allocation1 [shape = 'u32[144,128]{1,0:T(1,128)}', space=vmem, size = 0x12000, scoped, tag = 'internal scratch']
  #allocation2 [shape = 'f32[16,128]{1,0:T(8,128)}', space=vmem, size = 0x2000, scoped, tag = 'scratch operand']
  #allocation12 [shape = 's32[]', space=sflag, size = 0x4, offset = 0, fixed_abs, tag = 'sflag constant byte address 0x0 - dummy sync flag']
  %s0 = inlined_call_operand.hbm [shape: f32[32,128], index: 0, kind: input, shape index: {}]
  %s1 = inlined_call_operand.hbm [shape: bf16[2,384,128], index: 1, kind: input, shape index: {}]
  %s2 = inlined_call_operand.vmem [shape: f32[2,1,128], index: 2, kind: input, shape index: {}]
  %s3 = inlined_call_operand.hbm [shape: bf16[256,256], index: 3, kind: input, shape index: {}]
  %s4 = inlined_call_operand.hbm [shape: bf16[128,256], index: 4, kind: input, shape index: {}]
  %s5 = inlined_call_operand.vmem [shape: f32[1,256], index: 5, kind: input, shape index: {}]
  %s6 = inlined_call_operand.hbm [shape: f32[2,32,256], index: 6, kind: output, shape index: {}]
  %s7 = sld [smem:[#allocation0]]
  $region73: #{tpu_custom_call.1} parent=0
    _
  %s9 = ssub.s32 1, %s7
  %s10 = scalar_select 0, %s9, %s7
  $region1: #{tpu_custom_call.1} parent=0
    #allocation3 [shape = 'u8[16384]{0}', space=vmem, size = 0x4000, scoped, tag = 'input window, operand 0']
    #allocation4 [shape = 's32[2]{0}', space=sflag, size = 0x8, scoped, tag = 'scoped memory for tpu_custom_call.1']
    #allocation5 [shape = 's32[2]{0}', space=sflag, size = 0x8, scoped, tag = 'scoped memory for tpu_custom_call.1']
    #allocation6 [shape = 'u8[196608]{0}', space=vmem, size = 0x30000, scoped, tag = 'input window, operand 1, single buffered']
    #allocation7 [shape = 's32[1]{0}', space=sflag, size = 0x4, scoped, tag = 'scoped memory for tpu_custom_call.1']
    #allocation8 [shape = 'u8[131072]{0}', space=vmem, size = 0x20000, scoped, tag = 'input window, operand 3, single buffered']
    #allocation9 [shape = 'u8[65536]{0}', space=vmem, size = 0x10000, scoped, tag = 'input window, operand 4, single buffered']
    #allocation10 [shape = 's32[1]{0}', space=sflag, size = 0x4, scoped, tag = 'scoped memory for tpu_custom_call.1']
    #allocation11 [shape = 'u8[65536]{0}', space=vmem, size = 0x10000, scoped, tag = 'output window, operand 0']
    %11 = vsyncpa [#allocation4], 0
    %s12 = scalar_lea.sflag [#allocation4], 1
    %13 = vsyncpa %s12, 0
    %14 = vsyncpa [#allocation7], 0
    %15 = vsyncpa [#allocation10], 0
    %16 = vsyncpa [#allocation5], 0
    %s17 = scalar_lea.sflag [#allocation5], 1
    %18 = vsyncpa %s17, 0
    loop: start=0, step=1, limit=4
    $region2: #{tpu_custom_call.1} parent=1 // loop_pre_header
      _
    $region3: #{tpu_custom_call.1} parent=1 // loop_header
      %s20 = sphi 0, %s24
      %p21 = scmp.ge.s32.totalorder %s20, 4
      %s30 = sphi 0, %s32
      %s33 = sphi 0, %s30
      %s34 = sphi 0, %s33
      %s50 = sphi 0, %s34
      %s54 = sphi 0, %s54
      %s56 = sphi 0, %s54
      %s57 = sphi 0, %s56
      %s71 = sphi 0, %s57
      %s75 = sphi 0, %s75
      %s77 = sphi 0, %s75
      %s78 = sphi 0, %s77
      %s92 = sphi 0, %s78
      %s96 = sphi 0, %s96
      %s98 = sphi 0, %s96
      %s99 = sphi 0, %s98
      %s113 = sphi 0, %s99
      %s117 = sphi 0, %s117
      %s119 = sphi 0, %s117
      %s120 = sphi 0, %s119
      %s134 = sphi 0, %s120
      %s138 = sphi 0, %s138
      %s140 = sphi 0, %s138
      %s141 = sphi 0, %s140
      %s155 = sphi 0, %s141
      %s161 = sphi 0, %s163
      %s164 = sphi 0, %s161
      %s165 = sphi 0, %s164
      %s181 = sphi 0, %s165
    $region4: #{tpu_custom_call.1} parent=1 // loop_header_branch
      %23 = sbr.rel (%p21) target = $region8
    $region5: #{tpu_custom_call.1} parent=1 // loop_body
      %s25 = ssub.s32 %s20, 1
      %s26 = ssub.s32 %s20, 2
      %s27 = sadd.s32 %s20, 1
      %s28 = ssub.s32 %s20, %s27
      %p29 = scmp.eq.s32.totalorder %s28, 0
      %s31 = sadd.s32 %s30, 1
      %s32 = scalar_select %p29, %s30, %s31
      %p35 = pneg %p29
      %p36 = scmp.eq.s32.totalorder %s20, 1
      %p37 = por %p35, %p36
      %p38 = scmp.ne.s32.totalorder %s30, %s33
      %p39 = scmp.eq.s32.totalorder %s20, 0
      %p40 = por %p38, %p39
      %p41 = scmp.ne.s32.totalorder %s30, %s33
      %p42 = scmp.eq.s32.totalorder %s25, 1
      %p43 = por %p41, %p42
      %p44 = scmp.ne.s32.totalorder %s33, %s34
      %p45 = scmp.eq.s32.totalorder %s25, 0
      %p46 = por %p44, %p45
      %p47 = scmp.ne.s32.totalorder %s33, %s34
      %p48 = scmp.eq.s32.totalorder %s26, 1
      %p49 = por %p47, %p48
      %p51 = scmp.ne.s32.totalorder %s34, %s50
      %p52 = scmp.eq.s32.totalorder %s26, 0
      %p53 = por %p51, %p52
      %s55 = sadd.s32 %s54, 1
      %p58 = scmp.eq.s32.totalorder %s20, 1
      %p59 = scmp.ne.s32.totalorder %s54, %s56
      %p60 = scmp.eq.s32.totalorder %s20, 0
      %p61 = por %p59, %p60
      %p62 = scmp.ne.s32.totalorder %s54, %s56
      %p63 = scmp.eq.s32.totalorder %s25, 1
      %p64 = por %p62, %p63
      %p65 = scmp.ne.s32.totalorder %s56, %s57
      %p66 = scmp.eq.s32.totalorder %s25, 0
      %p67 = por %p65, %p66
      %p68 = scmp.ne.s32.totalorder %s56, %s57
      %p69 = scmp.eq.s32.totalorder %s26, 1
      %p70 = por %p68, %p69
      %p72 = scmp.ne.s32.totalorder %s57, %s71
      %p73 = scmp.eq.s32.totalorder %s26, 0
      %p74 = por %p72, %p73
      %s76 = sadd.s32 %s75, 1
      %p79 = scmp.eq.s32.totalorder %s20, 1
      %p80 = scmp.ne.s32.totalorder %s75, %s77
      %p81 = scmp.eq.s32.totalorder %s20, 0
      %p82 = por %p80, %p81
      %p83 = scmp.ne.s32.totalorder %s75, %s77
      %p84 = scmp.eq.s32.totalorder %s25, 1
      %p85 = por %p83, %p84
      %p86 = scmp.ne.s32.totalorder %s77, %s78
      %p87 = scmp.eq.s32.totalorder %s25, 0
      %p88 = por %p86, %p87
      %p89 = scmp.ne.s32.totalorder %s77, %s78
      %p90 = scmp.eq.s32.totalorder %s26, 1
      %p91 = por %p89, %p90
      %p93 = scmp.ne.s32.totalorder %s78, %s92
      %p94 = scmp.eq.s32.totalorder %s26, 0
      %p95 = por %p93, %p94
      %s97 = sadd.s32 %s96, 1
      %p100 = scmp.eq.s32.totalorder %s20, 1
      %p101 = scmp.ne.s32.totalorder %s96, %s98
      %p102 = scmp.eq.s32.totalorder %s20, 0
      %p103 = por %p101, %p102
      %p104 = scmp.ne.s32.totalorder %s96, %s98
      %p105 = scmp.eq.s32.totalorder %s25, 1
      %p106 = por %p104, %p105
      %p107 = scmp.ne.s32.totalorder %s98, %s99
      %p108 = scmp.eq.s32.totalorder %s25, 0
      %p109 = por %p107, %p108
      %p110 = scmp.ne.s32.totalorder %s98, %s99
      %p111 = scmp.eq.s32.totalorder %s26, 1
      %p112 = por %p110, %p111
      %p114 = scmp.ne.s32.totalorder %s99, %s113
      %p115 = scmp.eq.s32.totalorder %s26, 0
      %p116 = por %p114, %p115
      %s118 = sadd.s32 %s117, 1
      %p121 = scmp.eq.s32.totalorder %s20, 1
      %p122 = scmp.ne.s32.totalorder %s117, %s119
      %p123 = scmp.eq.s32.totalorder %s20, 0
      %p124 = por %p122, %p123
      %p125 = scmp.ne.s32.totalorder %s117, %s119
      %p126 = scmp.eq.s32.totalorder %s25, 1
      %p127 = por %p125, %p126
      %p128 = scmp.ne.s32.totalorder %s119, %s120
      %p129 = scmp.eq.s32.totalorder %s25, 0
      %p130 = por %p128, %p129
      %p131 = scmp.ne.s32.totalorder %s119, %s120
      %p132 = scmp.eq.s32.totalorder %s26, 1
      %p133 = por %p131, %p132
      %p135 = scmp.ne.s32.totalorder %s120, %s134
      %p136 = scmp.eq.s32.totalorder %s26, 0
      %p137 = por %p135, %p136
      %s139 = sadd.s32 %s138, 1
      %p142 = scmp.eq.s32.totalorder %s20, 1
      %p143 = scmp.ne.s32.totalorder %s138, %s140
      %p144 = scmp.eq.s32.totalorder %s20, 0
      %p145 = por %p143, %p144
      %p146 = scmp.ne.s32.totalorder %s138, %s140
      %p147 = scmp.eq.s32.totalorder %s25, 1
      %p148 = por %p146, %p147
      %p149 = scmp.ne.s32.totalorder %s140, %s141
      %p150 = scmp.eq.s32.totalorder %s25, 0
      %p151 = por %p149, %p150
      %p152 = scmp.ne.s32.totalorder %s140, %s141
      %p153 = scmp.eq.s32.totalorder %s26, 1
      %p154 = por %p152, %p153
      %p156 = scmp.ne.s32.totalorder %s141, %s155
      %p157 = scmp.eq.s32.totalorder %s26, 0
      %p158 = por %p156, %p157
      %s159 = ssub.s32 %s20, %s27
      %p160 = scmp.eq.s32.totalorder %s159, 0
      %s162 = sadd.s32 %s161, 1
      %s163 = scalar_select %p160, %s161, %s162
      %p166 = pneg %p160
      %p167 = scmp.eq.s32.totalorder %s20, 1
      %p168 = por %p166, %p167
      %p169 = scmp.ne.s32.totalorder %s161, %s164
      %p170 = scmp.eq.s32.totalorder %s20, 0
      %p171 = por %p169, %p170
      %p172 = scmp.ne.s32.totalorder %s161, %s164
      %p173 = scmp.eq.s32.totalorder %s25, 1
      %p174 = por %p172, %p173
      %p175 = scmp.ne.s32.totalorder %s164, %s165
      %p176 = scmp.eq.s32.totalorder %s25, 0
      %p177 = por %p175, %p176
      %p178 = scmp.ne.s32.totalorder %s164, %s165
      %p179 = scmp.eq.s32.totalorder %s26, 1
      %p180 = por %p178, %p179
      %p182 = scmp.ne.s32.totalorder %s165, %s181
      %p183 = scmp.eq.s32.totalorder %s26, 0
      %p184 = por %p182, %p183
      %p185 = scmp.le.s32.totalorder 1, %s20
      %p186 = scmp.lt.s32.totalorder %s20, 3
      %p187 = pnand %p185, %p186
      %p188 = pneg %p187
      // Predicated region
      $region9: #{tpu_custom_call.1} parent=5 // pred_check
        _
      $region10: #{tpu_custom_call.1} parent=5 // pred_check_branch
        %190 = sbr.rel (%p187) target = $region12
      $region11: #{tpu_custom_call.1} parent=5 // pred_region
        %s191 = ssub.s32 %s20, 1
        // Predicated region
        $region13: #{tpu_custom_call.1} parent=11 // pred_check
          %p192 = pneg %p67
        $region14: #{tpu_custom_call.1} parent=11 // pred_check_branch
          %194 = sbr.rel (%p192) target = $region16
        $region15: #{tpu_custom_call.1} parent=11 // pred_region
          %s196 = ssub.s32 6144, 6144
          %197 = vsyncadd [#allocation7], %s196
          %s198 = sshll.u32 [#allocation6], 4
          %s199 = int_to_ptr.vmem [resolvable:$true] %s198
          %204 = dma.hbm_to_vmem [thread:$0]  %s1, 6144, %s199, [#allocation7], 64, 64, 4
        $region16: #{tpu_custom_call.1} parent=11 // pred_fallthru
          _
        // Predicated region
        $region17: #{tpu_custom_call.1} parent=11 // pred_check
          %p205 = pneg %p88
        $region18: #{tpu_custom_call.1} parent=11 // pred_check_branch
          %207 = sbr.rel (%p205) target = $region20
        $region19: #{tpu_custom_call.1} parent=11 // pred_region
          _
        $region20: #{tpu_custom_call.1} parent=11 // pred_fallthru
          _
        // Predicated region
        $region21: #{tpu_custom_call.1} parent=11 // pred_check
          %p208 = pneg %p109
        $region22: #{tpu_custom_call.1} parent=11 // pred_check_branch
          %210 = sbr.rel (%p208) target = $region24
        $region23: #{tpu_custom_call.1} parent=11 // pred_region
          %s212 = ssub.s32 4096, 4096
          %213 = vsyncadd [#allocation7], %s212
          %s214 = sshll.u32 [#allocation8], 4
          %s215 = int_to_ptr.vmem [resolvable:$true] %s214
          %220 = dma.hbm_to_vmem [thread:$0]  %s3, 4096, %s215, [#allocation7], 128, 128, 8
        $region24: #{tpu_custom_call.1} parent=11 // pred_fallthru
          _
        // Predicated region
        $region25: #{tpu_custom_call.1} parent=11 // pred_check
          %p221 = pneg %p130
        $region26: #{tpu_custom_call.1} parent=11 // pred_check_branch
          %223 = sbr.rel (%p221) target = $region28
        $region27: #{tpu_custom_call.1} parent=11 // pred_region
          %s225 = ssub.s32 2048, 2048
          %226 = vsyncadd [#allocation10], %s225
          %s227 = sshll.u32 [#allocation9], 4
          %s228 = int_to_ptr.vmem [resolvable:$true] %s227
          %233 = dma.hbm_to_vmem [thread:$0]  %s4, 2048, %s228, [#allocation10], 128, 128, 8
        $region28: #{tpu_custom_call.1} parent=11 // pred_fallthru
          _
        // Predicated region
        $region29: #{tpu_custom_call.1} parent=11 // pred_check
          %p234 = pneg %p151
        $region30: #{tpu_custom_call.1} parent=11 // pred_check_branch
          %236 = sbr.rel (%p234) target = $region32
        $region31: #{tpu_custom_call.1} parent=11 // pred_region
          _
        $region32: #{tpu_custom_call.1} parent=11 // pred_fallthru
          _
      $region12: #{tpu_custom_call.1} parent=5 // pred_fallthru
        _
      %p237 = scmp.lt.s32.totalorder %s20, 2
      // Predicated region
      $region33: #{tpu_custom_call.1} parent=5 // pred_check
        %p238 = pneg %p237
      $region34: #{tpu_custom_call.1} parent=5 // pred_check_branch
        %240 = sbr.rel (%p238) target = $region36
      $region35: #{tpu_custom_call.1} parent=5 // pred_region
        // Predicated region
        $region37: #{tpu_custom_call.1} parent=35 // pred_check
          %p241 = pneg %p40
        $region38: #{tpu_custom_call.1} parent=35 // pred_check_branch
          %243 = sbr.rel (%p241) target = $region40
        $region39: #{tpu_custom_call.1} parent=35 // pred_region
          %s244 = sand.u32 %s30, 1
          %s245 = scalar_lea.sflag [#allocation4], %s244
          %s246 = sand.u32 %s30, 1
          %s247 = smul.addr %s246, 16
          %s248 = scalar_lea.vmem [#allocation3], %s247
          %s249 = smul.u32 2, %s20
          %s251 = ssub.s32 256, 256
          %252 = vsyncadd %s245, %s251
          %s253 = smul.addr %s249, 128
          %s254 = scalar_lea.hbm %s0, %s253
          %s255 = sshll.u32 %s248, 4
          %s256 = int_to_ptr.vmem [resolvable:$true] %s255
          %261 = dma.hbm_to_vmem [thread:$0]  %s254, 256, %s256, %s245, 128, 128, 8
        $region40: #{tpu_custom_call.1} parent=35 // pred_fallthru
          _
      $region36: #{tpu_custom_call.1} parent=5 // pred_fallthru
        _
      %p262 = scmp.le.s32.totalorder 1, %s20
      %p263 = scmp.lt.s32.totalorder %s20, 3
      %p264 = pnand %p262, %p263
      %p265 = pneg %p264
      // Predicated region
      $region41: #{tpu_custom_call.1} parent=5 // pred_check
        _
      $region42: #{tpu_custom_call.1} parent=5 // pred_check_branch
        %267 = sbr.rel (%p264) target = $region44
      $region43: #{tpu_custom_call.1} parent=5 // pred_region
        %s268 = ssub.s32 %s20, 1
        %s269 = sand.u32 %s33, 1
        %s270 = scalar_lea.sflag [#allocation4], %s269
        %s271 = sand.u32 %s33, 1
        %s272 = smul.addr %s271, 16
        %s273 = scalar_lea.vmem [#allocation3], %s272
        // Predicated region
        $region45: #{tpu_custom_call.1} parent=43 // pred_check
          %p274 = pneg %p46
        $region46: #{tpu_custom_call.1} parent=43 // pred_check_branch
          %276 = sbr.rel (%p274) target = $region48
        $region47: #{tpu_custom_call.1} parent=43 // pred_region
          %277 = dma.done %s270, 256
        $region48: #{tpu_custom_call.1} parent=43 // pred_fallthru
          _
        // Predicated region
        $region49: #{tpu_custom_call.1} parent=43 // pred_check
          %p278 = pneg %p67
        $region50: #{tpu_custom_call.1} parent=43 // pred_check_branch
          %280 = sbr.rel (%p278) target = $region52
        $region51: #{tpu_custom_call.1} parent=43 // pred_region
          %281 = dma.done [#allocation7], 6144
        $region52: #{tpu_custom_call.1} parent=43 // pred_fallthru
          _
        // Predicated region
        $region53: #{tpu_custom_call.1} parent=43 // pred_check
          %p282 = pneg %p109
        $region54: #{tpu_custom_call.1} parent=43 // pred_check_branch
          %284 = sbr.rel (%p282) target = $region56
        $region55: #{tpu_custom_call.1} parent=43 // pred_region
          %285 = dma.done [#allocation7], 4096
        $region56: #{tpu_custom_call.1} parent=43 // pred_fallthru
          _
        // Predicated region
        $region57: #{tpu_custom_call.1} parent=43 // pred_check
          %p286 = pneg %p130
        $region58: #{tpu_custom_call.1} parent=43 // pred_check_branch
          %288 = sbr.rel (%p286) target = $region60
        $region59: #{tpu_custom_call.1} parent=43 // pred_region
          %289 = dma.done [#allocation10], 2048
        $region60: #{tpu_custom_call.1} parent=43 // pred_fallthru
          _
        %s290 = sand.u32 %s33, 1
        %s291 = scalar_lea.sflag [#allocation4], %s290
        %s292 = sand.u32 %s33, 1
        %s293 = smul.addr %s292, 16
        %s294 = scalar_lea.vmem [#allocation3], %s293
        %p295 = pneg %p46
        %p296 = pneg %p43
        %p297 = pneg %p67
        %p298 = pneg %p64
        %p299 = pneg %p88
        %p300 = pneg %p85
        %p301 = pneg %p109
        %p302 = pneg %p106
        %p303 = pneg %p130
        %p304 = pneg %p127
        %p305 = pneg %p151
        %p306 = pneg %p148
        %p307 = pneg %p177
        %p308 = pneg %p174
        %s309 = sand.u32 %s164, 1
        %s310 = scalar_lea.sflag [#allocation5], %s309
        %s311 = sand.u32 %s164, 1
        %s312 = smul.addr %s311, 64
        %s313 = scalar_lea.vmem [#allocation11], %s312
        %s314 = smul.u32 2, %s25
        %s315 = smul.u32 2, %s25
        %v317 = vlaneseq
        %v318 = vshrl.u32 %v317, 7
        %v319 = vadd.s32 %v318, 8
        %vm320 = vcmp.lt.s32.totalorder %v318, 0
        %v321 = vsub.s32 0, %v318
        %v322 = vsel %vm320, %v321, %v318
        %v323 = vshrl.u32 %v322, 4
        %v324 = vand.u32 %v322, 15
        %v325 = vsub.s32 0, %v324
        %v326 = vsel %vm320, %v325, %v324
        %vm327 = vcmp.lt.s32.totalorder %v319, 0
        %v328 = vsub.s32 0, %v319
        %v329 = vsel %vm327, %v328, %v319
        %v330 = vshrl.u32 %v329, 4
        %v331 = vand.u32 %v329, 15
        %v332 = vsub.s32 0, %v331
        %v333 = vsel %vm327, %v332, %v331
        %vm334 = vcmp.ne.s32.totalorder %v326, 0
        %vm335 = vcmp.ne.s32.totalorder %v333, 0
        %vm336 = vcmp.lt.s32.totalorder %v326, 0
        %vm337 = vcmp.lt.s32.totalorder %v333, 0
        %vm338 = vmand %vm336, %vm334
        %vm339 = vmand %vm337, %vm335
        %v340 = vadd.s32 %v326, 16
        %v341 = vadd.s32 %v333, 16
        %v342 = vsel %vm338, %v340, %v326
        %v343 = vsel %vm339, %v341, %v333
        %vm344 = vcmp.ne.s32.totalorder %v342, 0
        %vm345 = vcmp.ne.s32.totalorder %v343, 0
        %v346 = vsel %vm344, 1, 0
        %v347 = vsel %vm345, 1, 0
        %v348 = vcvt.s32.f32 %v346
        %v349 = vcvt.s32.f32 %v347
        %vm350 = vcmp.ne.s32.totalorder %v342, 15
        %vm351 = vcmp.ne.s32.totalorder %v343, 15
        %v352 = vsel %vm350, 1, 0
        %v353 = vsel %vm351, 1, 0
        %v354 = vcvt.s32.f32 %v352
        %v355 = vcvt.s32.f32 %v353
        %v356 = vld [vmem:[%s273] sm:$0xff]
        %v357 = vld [vmem:[%s273 + $0x8] sm:$0xff]
        %358 = vst [vmem:[#allocation2] sm:$0xff] %v356
        %359 = vst [vmem:[#allocation2 + $0x8] sm:$0xff] %v357
        %vm360 = vcmp.ge.f32.partialorder %v356, 0.0
        %vm361 = vcmp.ge.f32.partialorder %v357, 0.0
        %v362 = vmul.f32 %v356, 0.2
        %v363 = vmul.f32 %v357, 0.2
        %v364 = vsel %vm360, %v356, %v362
        %v365 = vsel %vm361, %v357, %v363
        %v366 = vrot.slane %v364, 7
        %v367 = vrot.slane %v365, 7
        %vm368 = vcmp.lt.s32.totalorder %v318, 1
        %v369 = vsel %vm368, %v366, %v367
        %v370 = vsel %vm368, %v367, %v366
        %v371 = vmul.f32 %v370, %v348
        %v372 = vmul.f32 %v369, %v349
        %v373 = vrot.slane %v364, 1
        %v374 = vrot.slane %v365, 1
        %vm375 = vcmp.lt.s32.totalorder %v318, 7
        %v376 = vsel %vm375, %v373, %v374
        %v377 = vsel %vm375, %v374, %v373
        %v378 = vmul.f32 %v376, %v354
        %v379 = vmul.f32 %v377, %v355
        %v380 = vpack.c.bf16 %v372, %v371
        %v381 = vpack.c.bf16 %v365, %v364
        %v382 = vpack.c.bf16 %v379, %v378
        %v383 = vld [vmem:[#allocation6] sm:$0xf]
        %v384 = vld [vmem:[#allocation6 + $0x4] sm:$0xf]
        %v385 = vld [vmem:[#allocation6 + $0x8] sm:$0xf]
        %v386 = vld [vmem:[#allocation6 + $0xc] sm:$0xf]
        %v387 = vld [vmem:[#allocation6 + $0x10] sm:$0xf]
        %v388 = vld [vmem:[#allocation6 + $0x14] sm:$0xf]
        %v389 = vld [vmem:[#allocation6 + $0x18] sm:$0xf]
        %v390 = vld [vmem:[#allocation6 + $0x1c] sm:$0xf]
        %v391 = vld [vmem:[#allocation6 + $0x20] sm:$0xf]
        %v392 = vld [vmem:[#allocation6 + $0x24] sm:$0xf]
        %v393 = vld [vmem:[#allocation6 + $0x28] sm:$0xf]
        %v394 = vld [vmem:[#allocation6 + $0x2c] sm:$0xf]
        %v395 = vld [vmem:[#allocation6 + $0x30] sm:$0xf]
        %v396 = vld [vmem:[#allocation6 + $0x34] sm:$0xf]
        %v397 = vld [vmem:[#allocation6 + $0x38] sm:$0xf]
        %v398 = vld [vmem:[#allocation6 + $0x3c] sm:$0xf]
        %v399 = vld [vmem:[#allocation6 + $0x40] sm:$0xf]
        %v400 = vld [vmem:[#allocation6 + $0x44] sm:$0xf]
        %v401 = vld [vmem:[#allocation6 + $0x48] sm:$0xf]
        %v402 = vld [vmem:[#allocation6 + $0x4c] sm:$0xf]
        %v403 = vld [vmem:[#allocation6 + $0x50] sm:$0xf]
        %v404 = vld [vmem:[#allocation6 + $0x54] sm:$0xf]
        %v405 = vld [vmem:[#allocation6 + $0x58] sm:$0xf]
        %v406 = vld [vmem:[#allocation6 + $0x5c] sm:$0xf]
        %v407 = vld [vmem:[#allocation6 + $0x60] sm:$0xf]
        %v408 = vld [vmem:[#allocation6 + $0x64] sm:$0xf]
        %v409 = vld [vmem:[#allocation6 + $0x68] sm:$0xf]
        %v410 = vld [vmem:[#allocation6 + $0x6c] sm:$0xf]
        %v411 = vld [vmem:[#allocation6 + $0x70] sm:$0xf]
        %v412 = vld [vmem:[#allocation6 + $0x74] sm:$0xf]
        %v413 = vld [vmem:[#allocation6 + $0x78] sm:$0xf]
        %v414 = vld [vmem:[#allocation6 + $0x7c] sm:$0xf]
        %v415 = vld [vmem:[#allocation6 + $0x80] sm:$0xf]
        %v416 = vld [vmem:[#allocation6 + $0x84] sm:$0xf]
        %v417 = vld [vmem:[#allocation6 + $0x88] sm:$0xf]
        %v418 = vld [vmem:[#allocation6 + $0x8c] sm:$0xf]
        %v419 = vld [vmem:[#allocation6 + $0x90] sm:$0xf]
        %v420 = vld [vmem:[#allocation6 + $0x94] sm:$0xf]
        %v421 = vld [vmem:[#allocation6 + $0x98] sm:$0xf]
        %v422 = vld [vmem:[#allocation6 + $0x9c] sm:$0xf]
        %v423 = vld [vmem:[#allocation6 + $0xa0] sm:$0xf]
        %v424 = vld [vmem:[#allocation6 + $0xa4] sm:$0xf]
        %v425 = vld [vmem:[#allocation6 + $0xa8] sm:$0xf]
        %v426 = vld [vmem:[#allocation6 + $0xac] sm:$0xf]
        %v427 = vld [vmem:[#allocation6 + $0xb0] sm:$0xf]
        %v428 = vld [vmem:[#allocation6 + $0xb4] sm:$0xf]
        %v429 = vld [vmem:[#allocation6 + $0xb8] sm:$0xf]
        %v430 = vld [vmem:[#allocation6 + $0xbc] sm:$0xf]
        %v431 = vld [vmem:[%s2] sm:$0x1]
        %v433 = vlaneseq
        %v434 = vshrl.u32 %v433, 7
        %v435 = vsub.s32 0, %v434
        %v436 = vrot.slane %v431, %v435
        %v486 = vunpack.c.l.b16 %v383
        %v487 = vunpack.c.l.b16 %v384
        %v488 = vunpack.c.l.b16 %v385
        %v489 = vunpack.c.l.b16 %v386
        %v490 = vunpack.c.l.b16 %v387
        %v491 = vunpack.c.l.b16 %v388
        %v492 = vunpack.c.l.b16 %v389
        %v493 = vunpack.c.l.b16 %v390
        %v494 = vunpack.c.l.b16 %v391
        %v495 = vunpack.c.l.b16 %v392
        %v496 = vunpack.c.l.b16 %v393
        %v497 = vunpack.c.l.b16 %v394
        %v498 = vunpack.c.l.b16 %v395
        %v499 = vunpack.c.l.b16 %v396
        %v500 = vunpack.c.l.b16 %v397
        %v501 = vunpack.c.l.b16 %v398
        %v502 = vunpack.c.l.b16 %v399
        %v503 = vunpack.c.l.b16 %v400
        %v504 = vunpack.c.l.b16 %v401
        %v505 = vunpack.c.l.b16 %v402
        %v506 = vunpack.c.l.b16 %v403
        %v507 = vunpack.c.l.b16 %v404
        %v508 = vunpack.c.l.b16 %v405
        %v509 = vunpack.c.l.b16 %v406
        %v510 = vunpack.c.l.b16 %v407
        %v511 = vunpack.c.l.b16 %v408
        %v512 = vunpack.c.l.b16 %v409
        %v513 = vunpack.c.l.b16 %v410
        %v514 = vunpack.c.l.b16 %v411
        %v515 = vunpack.c.l.b16 %v412
        %v516 = vunpack.c.l.b16 %v413
        %v517 = vunpack.c.l.b16 %v414
        %v518 = vunpack.c.l.b16 %v415
        %v519 = vunpack.c.l.b16 %v416
        %v520 = vunpack.c.l.b16 %v417
        %v521 = vunpack.c.l.b16 %v418
        %v522 = vunpack.c.l.b16 %v419
        %v523 = vunpack.c.l.b16 %v420
        %v524 = vunpack.c.l.b16 %v421
        %v525 = vunpack.c.l.b16 %v422
        %v526 = vunpack.c.l.b16 %v423
        %v527 = vunpack.c.l.b16 %v424
        %v528 = vunpack.c.l.b16 %v425
        %v529 = vunpack.c.l.b16 %v426
        %v530 = vunpack.c.l.b16 %v427
        %v531 = vunpack.c.l.b16 %v428
        %v532 = vunpack.c.l.b16 %v429
        %v533 = vunpack.c.l.b16 %v430
        %v534 = vpack.c.b16 %v487, %v486
        %v535 = vpack.c.b16 %v489, %v488
        %v536 = vpack.c.b16 %v491, %v490
        %v537 = vpack.c.b16 %v493, %v492
        %v538 = vpack.c.b16 %v495, %v494
        %v539 = vpack.c.b16 %v497, %v496
        %v540 = vpack.c.b16 %v499, %v498
        %v541 = vpack.c.b16 %v501, %v500
        %v542 = vpack.c.b16 %v503, %v502
        %v543 = vpack.c.b16 %v505, %v504
        %v544 = vpack.c.b16 %v507, %v506
        %v545 = vpack.c.b16 %v509, %v508
        %v546 = vpack.c.b16 %v511, %v510
        %v547 = vpack.c.b16 %v513, %v512
        %v548 = vpack.c.b16 %v515, %v514
        %v549 = vpack.c.b16 %v517, %v516
        %v550 = vpack.c.b16 %v519, %v518
        %v551 = vpack.c.b16 %v521, %v520
        %v552 = vpack.c.b16 %v523, %v522
        %v553 = vpack.c.b16 %v525, %v524
        %v554 = vpack.c.b16 %v527, %v526
        %v555 = vpack.c.b16 %v529, %v528
        %v556 = vpack.c.b16 %v531, %v530
        %v557 = vpack.c.b16 %v533, %v532
        %582 = vmatprep.subr.bf16.mxu0 0
        %583 = vmatpush1.bf16.msra.mxu0 %v534
        %584 = vmatprep.subr.bf16.mxu0 0
        %585 = vmatpush1.bf16.msra.mxu0 %v535
        %586 = vmatprep.subr.bf16.mxu0 0
        %587 = vmatpush1.bf16.msra.mxu0 %v536
        %588 = vmatprep.subr.bf16.mxu0 0
        %589 = vmatpush1.bf16.msra.mxu0 %v537
        %590 = vmatprep.subr.bf16.mxu0 0
        %591 = vmatpush1.bf16.msra.mxu0 %v538
        %592 = vmatprep.subr.bf16.mxu0 0
        %593 = vmatpush1.bf16.msra.mxu0 %v539
        %594 = vmatprep.subr.bf16.mxu0 0
        %595 = vmatpush1.bf16.msra.mxu0 %v540
        %596 = vmatprep.subr.bf16.mxu0 0
        %597 = vmatpush1.bf16.msra.mxu0 %v541
        %598 = vmatprep.subr.bf16.mxu0 0
        %599 = vmatpush1.bf16.msra.mxu0 %v542
        %600 = vmatprep.subr.bf16.mxu0 0
        %601 = vmatpush1.bf16.msra.mxu0 %v543
        %602 = vmatprep.subr.bf16.mxu0 0
        %603 = vmatpush1.bf16.msra.mxu0 %v544
        %604 = vmatprep.subr.bf16.mxu0 0
        %605 = vmatpush1.bf16.msra.mxu0 %v545
        %606 = vmatprep.subr.bf16.mxu0 0
        %607 = vmatpush1.bf16.msra.mxu0 %v546
        %608 = vmatprep.subr.bf16.mxu0 0
        %609 = vmatpush1.bf16.msra.mxu0 %v547
        %610 = vmatprep.subr.bf16.mxu0 0
        %611 = vmatpush1.bf16.msra.mxu0 %v548
        %612 = vmatprep.subr.bf16.mxu0 0
        %613 = vmatpush1.bf16.msra.mxu0 %v549
        %614 = vmatprep.mubr.bf16.mxu0 %v381
        %615 = vmatmul.mubr.bf16.gmra.mrb[0].mxu0 %v380
        %v616 = vpop.f32.mrb[0].mxu0
        %v617 = vadd.f32 %v436, %v616
        %v618 = vpop.f32.mrb[0].mxu0
        %v619 = vpop.f32.mrb[0].mxu0
        %v620 = vadd.f32 %v436, %v619
        %v621 = vpop.f32.mrb[0].mxu0
        %622 = vdwg.mxu0
        %623 = vmatprep.subr.bf16.mxu0 0
        %624 = vmatpush1.bf16.msra.mxu0 %v550
        %625 = vmatprep.subr.bf16.mxu0 0
        %626 = vmatpush1.bf16.msra.mxu0 %v551
        %627 = vmatprep.subr.bf16.mxu0 0
        %628 = vmatpush1.bf16.msra.mxu0 %v552
        %629 = vmatprep.subr.bf16.mxu0 0
        %630 = vmatpush1.bf16.msra.mxu0 %v553
        %631 = vmatprep.subr.bf16.mxu0 0
        %632 = vmatpush1.bf16.msra.mxu0 %v554
        %633 = vmatprep.subr.bf16.mxu0 0
        %634 = vmatpush1.bf16.msra.mxu0 %v555
        %635 = vmatprep.subr.bf16.mxu0 0
        %636 = vmatpush1.bf16.msra.mxu0 %v556
        %637 = vmatprep.subr.bf16.mxu0 0
        %638 = vmatpush1.bf16.msra.mxu0 %v557
        %639 = vmatprep.subr.bf16.mxu0 0
        %640 = vmatpush1.bf16.msra.mxu0 0
        %641 = vmatprep.subr.bf16.mxu0 0
        %642 = vmatpush1.bf16.msra.mxu0 0
        %643 = vmatprep.subr.bf16.mxu0 0
        %644 = vmatpush1.bf16.msra.mxu0 0
        %645 = vmatprep.subr.bf16.mxu0 0
        %646 = vmatpush1.bf16.msra.mxu0 0
        %647 = vmatprep.subr.bf16.mxu0 0
        %648 = vmatpush1.bf16.msra.mxu0 0
        %649 = vmatprep.subr.bf16.mxu0 0
        %650 = vmatpush1.bf16.msra.mxu0 0
        %651 = vmatprep.subr.bf16.mxu0 0
        %652 = vmatpush1.bf16.msra.mxu0 0
        %653 = vmatprep.subr.bf16.mxu0 0
        %654 = vmatpush1.bf16.msra.mxu0 0
        %655 = vmatprep.mubr.bf16.mxu0 0
        %656 = vmatmul.mubr.bf16.gmra.mrb[0].mxu0 %v382
        %v657 = vpop.f32.mrb[0].mxu0
        %v658 = vadd.f32 %v617, %v657
        %v659 = vpop.f32.mrb[0].mxu0
        %v660 = vpop.f32.mrb[0].mxu0
        %v661 = vadd.f32 %v620, %v660
        %v662 = vpop.f32.mrb[0].mxu0
        %663 = vdwg.mxu0
        %vm664 = vcmp.ge.f32.partialorder %v658, 0.0
        %vm665 = vcmp.ge.f32.partialorder %v661, 0.0
        %v666 = vmul.f32 %v658, 0.2
        %v667 = vmul.f32 %v661, 0.2
        %v668 = vsel %vm664, %v658, %v666
        %v669 = vsel %vm665, %v661, %v667
        %v670 = vrot.slane %v668, 7
        %v671 = vrot.slane %v669, 7
        %v672 = vsel %vm368, %v670, %v671
        %v673 = vsel %vm368, %v671, %v670
        %v674 = vmul.f32 %v673, %v348
        %v675 = vmul.f32 %v672, %v349
        %v676 = vrot.slane %v668, 1
        %v677 = vrot.slane %v669, 1
        %v678 = vsel %vm375, %v676, %v677
        %v679 = vsel %vm375, %v677, %v676
        %v680 = vmul.f32 %v678, %v354
        %v681 = vmul.f32 %v679, %v355
        %v682 = vpack.c.bf16 %v675, %v674
        %v683 = vpack.c.bf16 %v669, %v668
        %v684 = vpack.c.bf16 %v681, %v680
        %s685 = scalar_lea.vmem [#allocation6], 192
        %v686 = vld [vmem:[%s685] sm:$0xf]
        %v687 = vld [vmem:[%s685 + $0x4] sm:$0xf]
        %v688 = vld [vmem:[%s685 + $0x8] sm:$0xf]
        %v689 = vld [vmem:[%s685 + $0xc] sm:$0xf]
        %v690 = vld [vmem:[%s685 + $0x10] sm:$0xf]
        %v691 = vld [vmem:[%s685 + $0x14] sm:$0xf]
        %v692 = vld [vmem:[%s685 + $0x18] sm:$0xf]
        %v693 = vld [vmem:[%s685 + $0x1c] sm:$0xf]
        %v694 = vld [vmem:[%s685 + $0x20] sm:$0xf]
        %v695 = vld [vmem:[%s685 + $0x24] sm:$0xf]
        %v696 = vld [vmem:[%s685 + $0x28] sm:$0xf]
        %v697 = vld [vmem:[%s685 + $0x2c] sm:$0xf]
        %v698 = vld [vmem:[%s685 + $0x30] sm:$0xf]
        %v699 = vld [vmem:[%s685 + $0x34] sm:$0xf]
        %v700 = vld [vmem:[%s685 + $0x38] sm:$0xf]
        %v701 = vld [vmem:[%s685 + $0x3c] sm:$0xf]
        %v702 = vld [vmem:[%s685 + $0x40] sm:$0xf]
        %v703 = vld [vmem:[%s685 + $0x44] sm:$0xf]
        %v704 = vld [vmem:[%s685 + $0x48] sm:$0xf]
        %v705 = vld [vmem:[%s685 + $0x4c] sm:$0xf]
        %v706 = vld [vmem:[%s685 + $0x50] sm:$0xf]
        %v707 = vld [vmem:[%s685 + $0x54] sm:$0xf]
        %v708 = vld [vmem:[%s685 + $0x58] sm:$0xf]
        %v709 = vld [vmem:[%s685 + $0x5c] sm:$0xf]
        %v710 = vld [vmem:[%s685 + $0x60] sm:$0xf]
        %v711 = vld [vmem:[%s685 + $0x64] sm:$0xf]
        %v712 = vld [vmem:[%s685 + $0x68] sm:$0xf]
        %v713 = vld [vmem:[%s685 + $0x6c] sm:$0xf]
        %v714 = vld [vmem:[%s685 + $0x70] sm:$0xf]
        %v715 = vld [vmem:[%s685 + $0x74] sm:$0xf]
        %v716 = vld [vmem:[%s685 + $0x78] sm:$0xf]
        %v717 = vld [vmem:[%s685 + $0x7c] sm:$0xf]
        %v718 = vld [vmem:[%s685 + $0x80] sm:$0xf]
        %v719 = vld [vmem:[%s685 + $0x84] sm:$0xf]
        %v720 = vld [vmem:[%s685 + $0x88] sm:$0xf]
        %v721 = vld [vmem:[%s685 + $0x8c] sm:$0xf]
        %v722 = vld [vmem:[%s685 + $0x90] sm:$0xf]
        %v723 = vld [vmem:[%s685 + $0x94] sm:$0xf]
        %v724 = vld [vmem:[%s685 + $0x98] sm:$0xf]
        %v725 = vld [vmem:[%s685 + $0x9c] sm:$0xf]
        %v726 = vld [vmem:[%s685 + $0xa0] sm:$0xf]
        %v727 = vld [vmem:[%s685 + $0xa4] sm:$0xf]
        %v728 = vld [vmem:[%s685 + $0xa8] sm:$0xf]
        %v729 = vld [vmem:[%s685 + $0xac] sm:$0xf]
        %v730 = vld [vmem:[%s685 + $0xb0] sm:$0xf]
        %v731 = vld [vmem:[%s685 + $0xb4] sm:$0xf]
        %v732 = vld [vmem:[%s685 + $0xb8] sm:$0xf]
        %v733 = vld [vmem:[%s685 + $0xbc] sm:$0xf]
        %s734 = scalar_lea.vmem %s2, 1
        %v735 = vld [vmem:[%s734] sm:$0x1]
        %v737 = vlaneseq
        %v738 = vshrl.u32 %v737, 7
        %v739 = vsub.s32 0, %v738
        %v740 = vrot.slane %v735, %v739
        %v790 = vunpack.c.l.b16 %v686
        %v791 = vunpack.c.l.b16 %v687
        %v792 = vunpack.c.l.b16 %v688
        %v793 = vunpack.c.l.b16 %v689
        %v794 = vunpack.c.l.b16 %v690
        %v795 = vunpack.c.l.b16 %v691
        %v796 = vunpack.c.l.b16 %v692
        %v797 = vunpack.c.l.b16 %v693
        %v798 = vunpack.c.l.b16 %v694
        %v799 = vunpack.c.l.b16 %v695
        %v800 = vunpack.c.l.b16 %v696
        %v801 = vunpack.c.l.b16 %v697
        %v802 = vunpack.c.l.b16 %v698
        %v803 = vunpack.c.l.b16 %v699
        %v804 = vunpack.c.l.b16 %v700
        %v805 = vunpack.c.l.b16 %v701
        %v806 = vunpack.c.l.b16 %v702
        %v807 = vunpack.c.l.b16 %v703
        %v808 = vunpack.c.l.b16 %v704
        %v809 = vunpack.c.l.b16 %v705
        %v810 = vunpack.c.l.b16 %v706
        %v811 = vunpack.c.l.b16 %v707
        %v812 = vunpack.c.l.b16 %v708
        %v813 = vunpack.c.l.b16 %v709
        %v814 = vunpack.c.l.b16 %v710
        %v815 = vunpack.c.l.b16 %v711
        %v816 = vunpack.c.l.b16 %v712
        %v817 = vunpack.c.l.b16 %v713
        %v818 = vunpack.c.l.b16 %v714
        %v819 = vunpack.c.l.b16 %v715
        %v820 = vunpack.c.l.b16 %v716
        %v821 = vunpack.c.l.b16 %v717
        %v822 = vunpack.c.l.b16 %v718
        %v823 = vunpack.c.l.b16 %v719
        %v824 = vunpack.c.l.b16 %v720
        %v825 = vunpack.c.l.b16 %v721
        %v826 = vunpack.c.l.b16 %v722
        %v827 = vunpack.c.l.b16 %v723
        %v828 = vunpack.c.l.b16 %v724
        %v829 = vunpack.c.l.b16 %v725
        %v830 = vunpack.c.l.b16 %v726
        %v831 = vunpack.c.l.b16 %v727
        %v832 = vunpack.c.l.b16 %v728
        %v833 = vunpack.c.l.b16 %v729
        %v834 = vunpack.c.l.b16 %v730
        %v835 = vunpack.c.l.b16 %v731
        %v836 = vunpack.c.l.b16 %v732
        %v837 = vunpack.c.l.b16 %v733
        %v838 = vpack.c.b16 %v791, %v790
        %v839 = vpack.c.b16 %v793, %v792
        %v840 = vpack.c.b16 %v795, %v794
        %v841 = vpack.c.b16 %v797, %v796
        %v842 = vpack.c.b16 %v799, %v798
        %v843 = vpack.c.b16 %v801, %v800
        %v844 = vpack.c.b16 %v803, %v802
        %v845 = vpack.c.b16 %v805, %v804
        %v846 = vpack.c.b16 %v807, %v806
        %v847 = vpack.c.b16 %v809, %v808
        %v848 = vpack.c.b16 %v811, %v810
        %v849 = vpack.c.b16 %v813, %v812
        %v850 = vpack.c.b16 %v815, %v814
        %v851 = vpack.c.b16 %v817, %v816
        %v852 = vpack.c.b16 %v819, %v818
        %v853 = vpack.c.b16 %v821, %v820
        %v854 = vpack.c.b16 %v823, %v822
        %v855 = vpack.c.b16 %v825, %v824
        %v856 = vpack.c.b16 %v827, %v826
        %v857 = vpack.c.b16 %v829, %v828
        %v858 = vpack.c.b16 %v831, %v830
        %v859 = vpack.c.b16 %v833, %v832
        %v860 = vpack.c.b16 %v835, %v834
        %v861 = vpack.c.b16 %v837, %v836
        %886 = vmatprep.subr.bf16.mxu0 0
        %887 = vmatpush1.bf16.msra.mxu0 %v838
        %888 = vmatprep.subr.bf16.mxu0 0
        %889 = vmatpush1.bf16.msra.mxu0 %v839
        %890 = vmatprep.subr.bf16.mxu0 0
        %891 = vmatpush1.bf16.msra.mxu0 %v840
        %892 = vmatprep.subr.bf16.mxu0 0
        %893 = vmatpush1.bf16.msra.mxu0 %v841
        %894 = vmatprep.subr.bf16.mxu0 0
        %895 = vmatpush1.bf16.msra.mxu0 %v842
        %896 = vmatprep.subr.bf16.mxu0 0
        %897 = vmatpush1.bf16.msra.mxu0 %v843
        %898 = vmatprep.subr.bf16.mxu0 0
        %899 = vmatpush1.bf16.msra.mxu0 %v844
        %900 = vmatprep.subr.bf16.mxu0 0
        %901 = vmatpush1.bf16.msra.mxu0 %v845
        %902 = vmatprep.subr.bf16.mxu0 0
        %903 = vmatpush1.bf16.msra.mxu0 %v846
        %904 = vmatprep.subr.bf16.mxu0 0
        %905 = vmatpush1.bf16.msra.mxu0 %v847
        %906 = vmatprep.subr.bf16.mxu0 0
        %907 = vmatpush1.bf16.msra.mxu0 %v848
        %908 = vmatprep.subr.bf16.mxu0 0
        %909 = vmatpush1.bf16.msra.mxu0 %v849
        %910 = vmatprep.subr.bf16.mxu0 0
        %911 = vmatpush1.bf16.msra.mxu0 %v850
        %912 = vmatprep.subr.bf16.mxu0 0
        %913 = vmatpush1.bf16.msra.mxu0 %v851
        %914 = vmatprep.subr.bf16.mxu0 0
        %915 = vmatpush1.bf16.msra.mxu0 %v852
        %916 = vmatprep.subr.bf16.mxu0 0
        %917 = vmatpush1.bf16.msra.mxu0 %v853
        %918 = vmatprep.mubr.bf16.mxu0 %v683
        %919 = vmatmul.mubr.bf16.gmra.mrb[0].mxu0 %v682
        %v920 = vpop.f32.mrb[0].mxu0
        %v921 = vadd.f32 %v740, %v920
        %v922 = vpop.f32.mrb[0].mxu0
        %v923 = vpop.f32.mrb[0].mxu0
        %v924 = vadd.f32 %v740, %v923
        %v925 = vpop.f32.mrb[0].mxu0
        %926 = vdwg.mxu0
        %927 = vmatprep.subr.bf16.mxu0 0
        %928 = vmatpush1.bf16.msra.mxu0 %v854
        %929 = vmatprep.subr.bf16.mxu0 0
        %930 = vmatpush1.bf16.msra.mxu0 %v855
        %931 = vmatprep.subr.bf16.mxu0 0
        %932 = vmatpush1.bf16.msra.mxu0 %v856
        %933 = vmatprep.subr.bf16.mxu0 0
        %934 = vmatpush1.bf16.msra.mxu0 %v857
        %935 = vmatprep.subr.bf16.mxu0 0
        %936 = vmatpush1.bf16.msra.mxu0 %v858
        %937 = vmatprep.subr.bf16.mxu0 0
        %938 = vmatpush1.bf16.msra.mxu0 %v859
        %939 = vmatprep.subr.bf16.mxu0 0
        %940 = vmatpush1.bf16.msra.mxu0 %v860
        %941 = vmatprep.subr.bf16.mxu0 0
        %942 = vmatpush1.bf16.msra.mxu0 %v861
        %943 = vmatprep.subr.bf16.mxu0 0
        %944 = vmatpush1.bf16.msra.mxu0 0
        %945 = vmatprep.subr.bf16.mxu0 0
        %946 = vmatpush1.bf16.msra.mxu0 0
        %947 = vmatprep.subr.bf16.mxu0 0
        %948 = vmatpush1.bf16.msra.mxu0 0
        %949 = vmatprep.subr.bf16.mxu0 0
        %950 = vmatpush1.bf16.msra.mxu0 0
        %951 = vmatprep.subr.bf16.mxu0 0
        %952 = vmatpush1.bf16.msra.mxu0 0
        %953 = vmatprep.subr.bf16.mxu0 0
        %954 = vmatpush1.bf16.msra.mxu0 0
        %955 = vmatprep.subr.bf16.mxu0 0
        %956 = vmatpush1.bf16.msra.mxu0 0
        %957 = vmatprep.subr.bf16.mxu0 0
        %958 = vmatpush1.bf16.msra.mxu0 0
        %959 = vmatprep.mubr.bf16.mxu0 0
        %960 = vmatmul.mubr.bf16.gmra.mrb[0].mxu0 %v684
        %v961 = vpop.f32.mrb[0].mxu0
        %v962 = vadd.f32 %v921, %v961
        %v963 = vpop.f32.mrb[0].mxu0
        %v964 = vpop.f32.mrb[0].mxu0
        %v965 = vadd.f32 %v924, %v964
        %v966 = vpop.f32.mrb[0].mxu0
        %967 = vdwg.mxu0
        %v968 = vld [vmem:[#allocation2] sm:$0xff]
        %v969 = vld [vmem:[#allocation2 + $0x8] sm:$0xff]
        %v970 = vadd.f32 %v962, %v968
        %v971 = vadd.f32 %v965, %v969
        %972 = vst [vmem:[#allocation2] sm:$0xff] %v970
        %973 = vst [vmem:[#allocation2 + $0x8] sm:$0xff] %v971
        %vm974 = vcmp.ge.f32.partialorder %v970, 0.0
        %vm975 = vcmp.ge.f32.partialorder %v971, 0.0
        %v976 = vmul.f32 %v970, 0.2
        %v977 = vmul.f32 %v971, 0.2
        %v978 = vsel %vm974, %v970, %v976
        %v979 = vsel %vm975, %v971, %v977
        %v980 = vrot.slane %v978, 7
        %v981 = vrot.slane %v979, 7
        %v982 = vsel %vm368, %v980, %v981
        %v983 = vsel %vm368, %v981, %v980
        %v984 = vmul.f32 %v983, %v348
        %v985 = vmul.f32 %v982, %v349
        %v986 = vrot.slane %v978, 1
        %v987 = vrot.slane %v979, 1
        %v988 = vsel %vm375, %v986, %v987
        %v989 = vsel %vm375, %v987, %v986
        %v990 = vmul.f32 %v988, %v354
        %v991 = vmul.f32 %v989, %v355
        %v992 = vpack.c.bf16 %v985, %v984
        %v993 = vpack.c.bf16 %v979, %v978
        %v994 = vpack.c.bf16 %v991, %v990
        %v995 = vld [vmem:[#allocation6] sm:$0xf]
        %v996 = vld [vmem:[#allocation6 + $0x4] sm:$0xf]
        %v997 = vld [vmem:[#allocation6 + $0x8] sm:$0xf]
        %v998 = vld [vmem:[#allocation6 + $0xc] sm:$0xf]
        %v999 = vld [vmem:[#allocation6 + $0x10] sm:$0xf]
        %v1000 = vld [vmem:[#allocation6 + $0x14] sm:$0xf]
        %v1001 = vld [vmem:[#allocation6 + $0x18] sm:$0xf]
        %v1002 = vld [vmem:[#allocation6 + $0x1c] sm:$0xf]
        %v1003 = vld [vmem:[#allocation6 + $0x20] sm:$0xf]
        %v1004 = vld [vmem:[#allocation6 + $0x24] sm:$0xf]
        %v1005 = vld [vmem:[#allocation6 + $0x28] sm:$0xf]
        %v1006 = vld [vmem:[#allocation6 + $0x2c] sm:$0xf]
        %v1007 = vld [vmem:[#allocation6 + $0x30] sm:$0xf]
        %v1008 = vld [vmem:[#allocation6 + $0x34] sm:$0xf]
        %v1009 = vld [vmem:[#allocation6 + $0x38] sm:$0xf]
        %v1010 = vld [vmem:[#allocation6 + $0x3c] sm:$0xf]
        %v1011 = vld [vmem:[#allocation6 + $0x40] sm:$0xf]
        %v1012 = vld [vmem:[#allocation6 + $0x44] sm:$0xf]
        %v1013 = vld [vmem:[#allocation6 + $0x48] sm:$0xf]
        %v1014 = vld [vmem:[#allocation6 + $0x4c] sm:$0xf]
        %v1015 = vld [vmem:[#allocation6 + $0x50] sm:$0xf]
        %v1016 = vld [vmem:[#allocation6 + $0x54] sm:$0xf]
        %v1017 = vld [vmem:[#allocation6 + $0x58] sm:$0xf]
        %v1018 = vld [vmem:[#allocation6 + $0x5c] sm:$0xf]
        %v1019 = vld [vmem:[#allocation6 + $0x60] sm:$0xf]
        %v1020 = vld [vmem:[#allocation6 + $0x64] sm:$0xf]
        %v1021 = vld [vmem:[#allocation6 + $0x68] sm:$0xf]
        %v1022 = vld [vmem:[#allocation6 + $0x6c] sm:$0xf]
        %v1023 = vld [vmem:[#allocation6 + $0x70] sm:$0xf]
        %v1024 = vld [vmem:[#allocation6 + $0x74] sm:$0xf]
        %v1025 = vld [vmem:[#allocation6 + $0x78] sm:$0xf]
        %v1026 = vld [vmem:[#allocation6 + $0x7c] sm:$0xf]
        %v1027 = vld [vmem:[#allocation6 + $0x80] sm:$0xf]
        %v1028 = vld [vmem:[#allocation6 + $0x84] sm:$0xf]
        %v1029 = vld [vmem:[#allocation6 + $0x88] sm:$0xf]
        %v1030 = vld [vmem:[#allocation6 + $0x8c] sm:$0xf]
        %v1031 = vld [vmem:[#allocation6 + $0x90] sm:$0xf]
        %v1032 = vld [vmem:[#allocation6 + $0x94] sm:$0xf]
        %v1033 = vld [vmem:[#allocation6 + $0x98] sm:$0xf]
        %v1034 = vld [vmem:[#allocation6 + $0x9c] sm:$0xf]
        %v1035 = vld [vmem:[#allocation6 + $0xa0] sm:$0xf]
        %v1036 = vld [vmem:[#allocation6 + $0xa4] sm:$0xf]
        %v1037 = vld [vmem:[#allocation6 + $0xa8] sm:$0xf]
        %v1038 = vld [vmem:[#allocation6 + $0xac] sm:$0xf]
        %v1039 = vld [vmem:[#allocation6 + $0xb0] sm:$0xf]
        %v1040 = vld [vmem:[#allocation6 + $0xb4] sm:$0xf]
        %v1041 = vld [vmem:[#allocation6 + $0xb8] sm:$0xf]
        %v1042 = vld [vmem:[#allocation6 + $0xbc] sm:$0xf]
        %v1043 = vld [vmem:[%s2] sm:$0x1]
        %v1045 = vlaneseq
        %v1046 = vshrl.u32 %v1045, 7
        %v1047 = vsub.s32 0, %v1046
        %v1048 = vrot.slane %v1043, %v1047
        %v1098 = vunpack.c.l.b16 %v995
        %v1099 = vunpack.c.l.b16 %v996
        %v1100 = vunpack.c.l.b16 %v997
        %v1101 = vunpack.c.l.b16 %v998
        %v1102 = vunpack.c.l.b16 %v999
        %v1103 = vunpack.c.l.b16 %v1000
        %v1104 = vunpack.c.l.b16 %v1001
        %v1105 = vunpack.c.l.b16 %v1002
        %v1106 = vunpack.c.l.b16 %v1003
        %v1107 = vunpack.c.l.b16 %v1004
        %v1108 = vunpack.c.l.b16 %v1005
        %v1109 = vunpack.c.l.b16 %v1006
        %v1110 = vunpack.c.l.b16 %v1007
        %v1111 = vunpack.c.l.b16 %v1008
        %v1112 = vunpack.c.l.b16 %v1009
        %v1113 = vunpack.c.l.b16 %v1010
        %v1114 = vunpack.c.l.b16 %v1011
        %v1115 = vunpack.c.l.b16 %v1012
        %v1116 = vunpack.c.l.b16 %v1013
        %v1117 = vunpack.c.l.b16 %v1014
        %v1118 = vunpack.c.l.b16 %v1015
        %v1119 = vunpack.c.l.b16 %v1016
        %v1120 = vunpack.c.l.b16 %v1017
        %v1121 = vunpack.c.l.b16 %v1018
        %v1122 = vunpack.c.l.b16 %v1019
        %v1123 = vunpack.c.l.b16 %v1020
        %v1124 = vunpack.c.l.b16 %v1021
        %v1125 = vunpack.c.l.b16 %v1022
        %v1126 = vunpack.c.l.b16 %v1023
        %v1127 = vunpack.c.l.b16 %v1024
        %v1128 = vunpack.c.l.b16 %v1025
        %v1129 = vunpack.c.l.b16 %v1026
        %v1130 = vunpack.c.l.b16 %v1027
        %v1131 = vunpack.c.l.b16 %v1028
        %v1132 = vunpack.c.l.b16 %v1029
        %v1133 = vunpack.c.l.b16 %v1030
        %v1134 = vunpack.c.l.b16 %v1031
        %v1135 = vunpack.c.l.b16 %v1032
        %v1136 = vunpack.c.l.b16 %v1033
        %v1137 = vunpack.c.l.b16 %v1034
        %v1138 = vunpack.c.l.b16 %v1035
        %v1139 = vunpack.c.l.b16 %v1036
        %v1140 = vunpack.c.l.b16 %v1037
        %v1141 = vunpack.c.l.b16 %v1038
        %v1142 = vunpack.c.l.b16 %v1039
        %v1143 = vunpack.c.l.b16 %v1040
        %v1144 = vunpack.c.l.b16 %v1041
        %v1145 = vunpack.c.l.b16 %v1042
        %v1146 = vpack.c.b16 %v1099, %v1098
        %v1147 = vpack.c.b16 %v1101, %v1100
        %v1148 = vpack.c.b16 %v1103, %v1102
        %v1149 = vpack.c.b16 %v1105, %v1104
        %v1150 = vpack.c.b16 %v1107, %v1106
        %v1151 = vpack.c.b16 %v1109, %v1108
        %v1152 = vpack.c.b16 %v1111, %v1110
        %v1153 = vpack.c.b16 %v1113, %v1112
        %v1154 = vpack.c.b16 %v1115, %v1114
        %v1155 = vpack.c.b16 %v1117, %v1116
        %v1156 = vpack.c.b16 %v1119, %v1118
        %v1157 = vpack.c.b16 %v1121, %v1120
        %v1158 = vpack.c.b16 %v1123, %v1122
        %v1159 = vpack.c.b16 %v1125, %v1124
        %v1160 = vpack.c.b16 %v1127, %v1126
        %v1161 = vpack.c.b16 %v1129, %v1128
        %v1162 = vpack.c.b16 %v1131, %v1130
        %v1163 = vpack.c.b16 %v1133, %v1132
        %v1164 = vpack.c.b16 %v1135, %v1134
        %v1165 = vpack.c.b16 %v1137, %v1136
        %v1166 = vpack.c.b16 %v1139, %v1138
        %v1167 = vpack.c.b16 %v1141, %v1140
        %v1168 = vpack.c.b16 %v1143, %v1142
        %v1169 = vpack.c.b16 %v1145, %v1144
        %1194 = vmatprep.subr.bf16.mxu0 0
        %1195 = vmatpush1.bf16.msra.mxu0 %v1146
        %1196 = vmatprep.subr.bf16.mxu0 0
        %1197 = vmatpush1.bf16.msra.mxu0 %v1147
        %1198 = vmatprep.subr.bf16.mxu0 0
        %1199 = vmatpush1.bf16.msra.mxu0 %v1148
        %1200 = vmatprep.subr.bf16.mxu0 0
        %1201 = vmatpush1.bf16.msra.mxu0 %v1149
        %1202 = vmatprep.subr.bf16.mxu0 0
        %1203 = vmatpush1.bf16.msra.mxu0 %v1150
        %1204 = vmatprep.subr.bf16.mxu0 0
        %1205 = vmatpush1.bf16.msra.mxu0 %v1151
        %1206 = vmatprep.subr.bf16.mxu0 0
        %1207 = vmatpush1.bf16.msra.mxu0 %v1152
        %1208 = vmatprep.subr.bf16.mxu0 0
        %1209 = vmatpush1.bf16.msra.mxu0 %v1153
        %1210 = vmatprep.subr.bf16.mxu0 0
        %1211 = vmatpush1.bf16.msra.mxu0 %v1154
        %1212 = vmatprep.subr.bf16.mxu0 0
        %1213 = vmatpush1.bf16.msra.mxu0 %v1155
        %1214 = vmatprep.subr.bf16.mxu0 0
        %1215 = vmatpush1.bf16.msra.mxu0 %v1156
        %1216 = vmatprep.subr.bf16.mxu0 0
        %1217 = vmatpush1.bf16.msra.mxu0 %v1157
        %1218 = vmatprep.subr.bf16.mxu0 0
        %1219 = vmatpush1.bf16.msra.mxu0 %v1158
        %1220 = vmatprep.subr.bf16.mxu0 0
        %1221 = vmatpush1.bf16.msra.mxu0 %v1159
        %1222 = vmatprep.subr.bf16.mxu0 0
        %1223 = vmatpush1.bf16.msra.mxu0 %v1160
        %1224 = vmatprep.subr.bf16.mxu0 0
        %1225 = vmatpush1.bf16.msra.mxu0 %v1161
        %1226 = vmatprep.mubr.bf16.mxu0 %v993
        %1227 = vmatmul.mubr.bf16.gmra.mrb[0].mxu0 %v992
        %v1228 = vpop.f32.mrb[0].mxu0
        %v1229 = vadd.f32 %v1048, %v1228
        %v1230 = vpop.f32.mrb[0].mxu0
        %v1231 = vpop.f32.mrb[0].mxu0
        %v1232 = vadd.f32 %v1048, %v1231
        %v1233 = vpop.f32.mrb[0].mxu0
        %1234 = vdwg.mxu0
        %1235 = vmatprep.subr.bf16.mxu0 0
        %1236 = vmatpush1.bf16.msra.mxu0 %v1162
        %1237 = vmatprep.subr.bf16.mxu0 0
        %1238 = vmatpush1.bf16.msra.mxu0 %v1163
        %1239 = vmatprep.subr.bf16.mxu0 0
        %1240 = vmatpush1.bf16.msra.mxu0 %v1164
        %1241 = vmatprep.subr.bf16.mxu0 0
        %1242 = vmatpush1.bf16.msra.mxu0 %v1165
        %1243 = vmatprep.subr.bf16.mxu0 0
        %1244 = vmatpush1.bf16.msra.mxu0 %v1166
        %1245 = vmatprep.subr.bf16.mxu0 0
        %1246 = vmatpush1.bf16.msra.mxu0 %v1167
        %1247 = vmatprep.subr.bf16.mxu0 0
        %1248 = vmatpush1.bf16.msra.mxu0 %v1168
        %1249 = vmatprep.subr.bf16.mxu0 0
        %1250 = vmatpush1.bf16.msra.mxu0 %v1169
        %1251 = vmatprep.subr.bf16.mxu0 0
        %1252 = vmatpush1.bf16.msra.mxu0 0
        %1253 = vmatprep.subr.bf16.mxu0 0
        %1254 = vmatpush1.bf16.msra.mxu0 0
        %1255 = vmatprep.subr.bf16.mxu0 0
        %1256 = vmatpush1.bf16.msra.mxu0 0
        %1257 = vmatprep.subr.bf16.mxu0 0
        %1258 = vmatpush1.bf16.msra.mxu0 0
        %1259 = vmatprep.subr.bf16.mxu0 0
        %1260 = vmatpush1.bf16.msra.mxu0 0
        %1261 = vmatprep.subr.bf16.mxu0 0
        %1262 = vmatpush1.bf16.msra.mxu0 0
        %1263 = vmatprep.subr.bf16.mxu0 0
        %1264 = vmatpush1.bf16.msra.mxu0 0
        %1265 = vmatprep.subr.bf16.mxu0 0
        %1266 = vmatpush1.bf16.msra.mxu0 0
        %1267 = vmatprep.mubr.bf16.mxu0 0
        %1268 = vmatmul.mubr.bf16.gmra.mrb[0].mxu0 %v994
        %v1269 = vpop.f32.mrb[0].mxu0
        %v1270 = vadd.f32 %v1229, %v1269
        %v1271 = vpop.f32.mrb[0].mxu0
        %v1272 = vpop.f32.mrb[0].mxu0
        %v1273 = vadd.f32 %v1232, %v1272
        %v1274 = vpop.f32.mrb[0].mxu0
        %1275 = vdwg.mxu0
        %vm1276 = vcmp.ge.f32.partialorder %v1270, 0.0
        %vm1277 = vcmp.ge.f32.partialorder %v1273, 0.0
        %v1278 = vmul.f32 %v1270, 0.2
        %v1279 = vmul.f32 %v1273, 0.2
        %v1280 = vsel %vm1276, %v1270, %v1278
        %v1281 = vsel %vm1277, %v1273, %v1279
        %v1282 = vrot.slane %v1280, 7
        %v1283 = vrot.slane %v1281, 7
        %v1284 = vsel %vm368, %v1282, %v1283
        %v1285 = vsel %vm368, %v1283, %v1282
        %v1286 = vmul.f32 %v1285, %v348
        %v1287 = vmul.f32 %v1284, %v349
        %v1288 = vrot.slane %v1280, 1
        %v1289 = vrot.slane %v1281, 1
        %v1290 = vsel %vm375, %v1288, %v1289
        %v1291 = vsel %vm375, %v1289, %v1288
        %v1292 = vmul.f32 %v1290, %v354
        %v1293 = vmul.f32 %v1291, %v355
        %v1294 = vpack.c.bf16 %v1287, %v1286
        %v1295 = vpack.c.bf16 %v1281, %v1280
        %v1296 = vpack.c.bf16 %v1293, %v1292
        %v1297 = vld [vmem:[%s685] sm:$0xf]
        %v1298 = vld [vmem:[%s685 + $0x4] sm:$0xf]
        %v1299 = vld [vmem:[%s685 + $0x8] sm:$0xf]
        %v1300 = vld [vmem:[%s685 + $0xc] sm:$0xf]
        %v1301 = vld [vmem:[%s685 + $0x10] sm:$0xf]
        %v1302 = vld [vmem:[%s685 + $0x14] sm:$0xf]
        %v1303 = vld [vmem:[%s685 + $0x18] sm:$0xf]
        %v1304 = vld [vmem:[%s685 + $0x1c] sm:$0xf]
        %v1305 = vld [vmem:[%s685 + $0x20] sm:$0xf]
        %v1306 = vld [vmem:[%s685 + $0x24] sm:$0xf]
        %v1307 = vld [vmem:[%s685 + $0x28] sm:$0xf]
        %v1308 = vld [vmem:[%s685 + $0x2c] sm:$0xf]
        %v1309 = vld [vmem:[%s685 + $0x30] sm:$0xf]
        %v1310 = vld [vmem:[%s685 + $0x34] sm:$0xf]
        %v1311 = vld [vmem:[%s685 + $0x38] sm:$0xf]
        %v1312 = vld [vmem:[%s685 + $0x3c] sm:$0xf]
        %v1313 = vld [vmem:[%s685 + $0x40] sm:$0xf]
        %v1314 = vld [vmem:[%s685 + $0x44] sm:$0xf]
        %v1315 = vld [vmem:[%s685 + $0x48] sm:$0xf]
        %v1316 = vld [vmem:[%s685 + $0x4c] sm:$0xf]
        %v1317 = vld [vmem:[%s685 + $0x50] sm:$0xf]
        %v1318 = vld [vmem:[%s685 + $0x54] sm:$0xf]
        %v1319 = vld [vmem:[%s685 + $0x58] sm:$0xf]
        %v1320 = vld [vmem:[%s685 + $0x5c] sm:$0xf]
        %v1321 = vld [vmem:[%s685 + $0x60] sm:$0xf]
        %v1322 = vld [vmem:[%s685 + $0x64] sm:$0xf]
        %v1323 = vld [vmem:[%s685 + $0x68] sm:$0xf]
        %v1324 = vld [vmem:[%s685 + $0x6c] sm:$0xf]
        %v1325 = vld [vmem:[%s685 + $0x70] sm:$0xf]
        %v1326 = vld [vmem:[%s685 + $0x74] sm:$0xf]
        %v1327 = vld [vmem:[%s685 + $0x78] sm:$0xf]
        %v1328 = vld [vmem:[%s685 + $0x7c] sm:$0xf]
        %v1329 = vld [vmem:[%s685 + $0x80] sm:$0xf]
        %v1330 = vld [vmem:[%s685 + $0x84] sm:$0xf]
        %v1331 = vld [vmem:[%s685 + $0x88] sm:$0xf]
        %v1332 = vld [vmem:[%s685 + $0x8c] sm:$0xf]
        %v1333 = vld [vmem:[%s685 + $0x90] sm:$0xf]
        %v1334 = vld [vmem:[%s685 + $0x94] sm:$0xf]
        %v1335 = vld [vmem:[%s685 + $0x98] sm:$0xf]
        %v1336 = vld [vmem:[%s685 + $0x9c] sm:$0xf]
        %v1337 = vld [vmem:[%s685 + $0xa0] sm:$0xf]
        %v1338 = vld [vmem:[%s685 + $0xa4] sm:$0xf]
        %v1339 = vld [vmem:[%s685 + $0xa8] sm:$0xf]
        %v1340 = vld [vmem:[%s685 + $0xac] sm:$0xf]
        %v1341 = vld [vmem:[%s685 + $0xb0] sm:$0xf]
        %v1342 = vld [vmem:[%s685 + $0xb4] sm:$0xf]
        %v1343 = vld [vmem:[%s685 + $0xb8] sm:$0xf]
        %v1344 = vld [vmem:[%s685 + $0xbc] sm:$0xf]
        %v1345 = vld [vmem:[%s734] sm:$0x1]
        %v1347 = vlaneseq
        %v1348 = vshrl.u32 %v1347, 7
        %v1349 = vsub.s32 0, %v1348
        %v1350 = vrot.slane %v1345, %v1349
        %v1400 = vunpack.c.l.b16 %v1297
        %v1401 = vunpack.c.l.b16 %v1298
        %v1402 = vunpack.c.l.b16 %v1299
        %v1403 = vunpack.c.l.b16 %v1300
        %v1404 = vunpack.c.l.b16 %v1301
        %v1405 = vunpack.c.l.b16 %v1302
        %v1406 = vunpack.c.l.b16 %v1303
        %v1407 = vunpack.c.l.b16 %v1304
        %v1408 = vunpack.c.l.b16 %v1305
        %v1409 = vunpack.c.l.b16 %v1306
        %v1410 = vunpack.c.l.b16 %v1307
        %v1411 = vunpack.c.l.b16 %v1308
        %v1412 = vunpack.c.l.b16 %v1309
        %v1413 = vunpack.c.l.b16 %v1310
        %v1414 = vunpack.c.l.b16 %v1311
        %v1415 = vunpack.c.l.b16 %v1312
        %v1416 = vunpack.c.l.b16 %v1313
        %v1417 = vunpack.c.l.b16 %v1314
        %v1418 = vunpack.c.l.b16 %v1315
        %v1419 = vunpack.c.l.b16 %v1316
        %v1420 = vunpack.c.l.b16 %v1317
        %v1421 = vunpack.c.l.b16 %v1318
        %v1422 = vunpack.c.l.b16 %v1319
        %v1423 = vunpack.c.l.b16 %v1320
        %v1424 = vunpack.c.l.b16 %v1321
        %v1425 = vunpack.c.l.b16 %v1322
        %v1426 = vunpack.c.l.b16 %v1323
        %v1427 = vunpack.c.l.b16 %v1324
        %v1428 = vunpack.c.l.b16 %v1325
        %v1429 = vunpack.c.l.b16 %v1326
        %v1430 = vunpack.c.l.b16 %v1327
        %v1431 = vunpack.c.l.b16 %v1328
        %v1432 = vunpack.c.l.b16 %v1329
        %v1433 = vunpack.c.l.b16 %v1330
        %v1434 = vunpack.c.l.b16 %v1331
        %v1435 = vunpack.c.l.b16 %v1332
        %v1436 = vunpack.c.l.b16 %v1333
        %v1437 = vunpack.c.l.b16 %v1334
        %v1438 = vunpack.c.l.b16 %v1335
        %v1439 = vunpack.c.l.b16 %v1336
        %v1440 = vunpack.c.l.b16 %v1337
        %v1441 = vunpack.c.l.b16 %v1338
        %v1442 = vunpack.c.l.b16 %v1339
        %v1443 = vunpack.c.l.b16 %v1340
        %v1444 = vunpack.c.l.b16 %v1341
        %v1445 = vunpack.c.l.b16 %v1342
        %v1446 = vunpack.c.l.b16 %v1343
        %v1447 = vunpack.c.l.b16 %v1344
        %v1448 = vpack.c.b16 %v1401, %v1400
        %v1449 = vpack.c.b16 %v1403, %v1402
        %v1450 = vpack.c.b16 %v1405, %v1404
        %v1451 = vpack.c.b16 %v1407, %v1406
        %v1452 = vpack.c.b16 %v1409, %v1408
        %v1453 = vpack.c.b16 %v1411, %v1410
        %v1454 = vpack.c.b16 %v1413, %v1412
        %v1455 = vpack.c.b16 %v1415, %v1414
        %v1456 = vpack.c.b16 %v1417, %v1416
        %v1457 = vpack.c.b16 %v1419, %v1418
        %v1458 = vpack.c.b16 %v1421, %v1420
        %v1459 = vpack.c.b16 %v1423, %v1422
        %v1460 = vpack.c.b16 %v1425, %v1424
        %v1461 = vpack.c.b16 %v1427, %v1426
        %v1462 = vpack.c.b16 %v1429, %v1428
        %v1463 = vpack.c.b16 %v1431, %v1430
        %v1464 = vpack.c.b16 %v1433, %v1432
        %v1465 = vpack.c.b16 %v1435, %v1434
        %v1466 = vpack.c.b16 %v1437, %v1436
        %v1467 = vpack.c.b16 %v1439, %v1438
        %v1468 = vpack.c.b16 %v1441, %v1440
        %v1469 = vpack.c.b16 %v1443, %v1442
        %v1470 = vpack.c.b16 %v1445, %v1444
        %v1471 = vpack.c.b16 %v1447, %v1446
        %1496 = vmatprep.subr.bf16.mxu0 0
        %1497 = vmatpush1.bf16.msra.mxu0 %v1448
        %1498 = vmatprep.subr.bf16.mxu0 0
        %1499 = vmatpush1.bf16.msra.mxu0 %v1449
        %1500 = vmatprep.subr.bf16.mxu0 0
        %1501 = vmatpush1.bf16.msra.mxu0 %v1450
        %1502 = vmatprep.subr.bf16.mxu0 0
        %1503 = vmatpush1.bf16.msra.mxu0 %v1451
        %1504 = vmatprep.subr.bf16.mxu0 0
        %1505 = vmatpush1.bf16.msra.mxu0 %v1452
        %1506 = vmatprep.subr.bf16.mxu0 0
        %1507 = vmatpush1.bf16.msra.mxu0 %v1453
        %1508 = vmatprep.subr.bf16.mxu0 0
        %1509 = vmatpush1.bf16.msra.mxu0 %v1454
        %1510 = vmatprep.subr.bf16.mxu0 0
        %1511 = vmatpush1.bf16.msra.mxu0 %v1455
        %1512 = vmatprep.subr.bf16.mxu0 0
        %1513 = vmatpush1.bf16.msra.mxu0 %v1456
        %1514 = vmatprep.subr.bf16.mxu0 0
        %1515 = vmatpush1.bf16.msra.mxu0 %v1457
        %1516 = vmatprep.subr.bf16.mxu0 0
        %1517 = vmatpush1.bf16.msra.mxu0 %v1458
        %1518 = vmatprep.subr.bf16.mxu0 0
        %1519 = vmatpush1.bf16.msra.mxu0 %v1459
        %1520 = vmatprep.subr.bf16.mxu0 0
        %1521 = vmatpush1.bf16.msra.mxu0 %v1460
        %1522 = vmatprep.subr.bf16.mxu0 0
        %1523 = vmatpush1.bf16.msra.mxu0 %v1461
        %1524 = vmatprep.subr.bf16.mxu0 0
        %1525 = vmatpush1.bf16.msra.mxu0 %v1462
        %1526 = vmatprep.subr.bf16.mxu0 0
        %1527 = vmatpush1.bf16.msra.mxu0 %v1463
        %1528 = vmatprep.mubr.bf16.mxu0 %v1295
        %1529 = vmatmul.mubr.bf16.gmra.mrb[0].mxu0 %v1294
        %v1530 = vpop.f32.mrb[0].mxu0
        %v1531 = vadd.f32 %v1350, %v1530
        %v1532 = vpop.f32.mrb[0].mxu0
        %v1533 = vpop.f32.mrb[0].mxu0
        %v1534 = vadd.f32 %v1350, %v1533
        %v1535 = vpop.f32.mrb[0].mxu0
        %1536 = vdwg.mxu0
        %1537 = vmatprep.subr.bf16.mxu0 0
        %1538 = vmatpush1.bf16.msra.mxu0 %v1464
        %1539 = vmatprep.subr.bf16.mxu0 0
        %1540 = vmatpush1.bf16.msra.mxu0 %v1465
        %1541 = vmatprep.subr.bf16.mxu0 0
        %1542 = vmatpush1.bf16.msra.mxu0 %v1466
        %1543 = vmatprep.subr.bf16.mxu0 0
        %1544 = vmatpush1.bf16.msra.mxu0 %v1467
        %1545 = vmatprep.subr.bf16.mxu0 0
        %1546 = vmatpush1.bf16.msra.mxu0 %v1468
        %1547 = vmatprep.subr.bf16.mxu0 0
        %1548 = vmatpush1.bf16.msra.mxu0 %v1469
        %1549 = vmatprep.subr.bf16.mxu0 0
        %1550 = vmatpush1.bf16.msra.mxu0 %v1470
        %1551 = vmatprep.subr.bf16.mxu0 0
        %1552 = vmatpush1.bf16.msra.mxu0 %v1471
        %1553 = vmatprep.subr.bf16.mxu0 0
        %1554 = vmatpush1.bf16.msra.mxu0 0
        %1555 = vmatprep.subr.bf16.mxu0 0
        %1556 = vmatpush1.bf16.msra.mxu0 0
        %1557 = vmatprep.subr.bf16.mxu0 0
        %1558 = vmatpush1.bf16.msra.mxu0 0
        %1559 = vmatprep.subr.bf16.mxu0 0
        %1560 = vmatpush1.bf16.msra.mxu0 0
        %1561 = vmatprep.subr.bf16.mxu0 0
        %1562 = vmatpush1.bf16.msra.mxu0 0
        %1563 = vmatprep.subr.bf16.mxu0 0
        %1564 = vmatpush1.bf16.msra.mxu0 0
        %1565 = vmatprep.subr.bf16.mxu0 0
        %1566 = vmatpush1.bf16.msra.mxu0 0
        %1567 = vmatprep.subr.bf16.mxu0 0
        %1568 = vmatpush1.bf16.msra.mxu0 0
        %1569 = vmatprep.mubr.bf16.mxu0 0
        %1570 = vmatmul.mubr.bf16.gmra.mrb[0].mxu0 %v1296
        %v1571 = vpop.f32.mrb[0].mxu0
        %v1572 = vadd.f32 %v1531, %v1571
        %v1573 = vpop.f32.mrb[0].mxu0
        %v1574 = vpop.f32.mrb[0].mxu0
        %v1575 = vadd.f32 %v1534, %v1574
        %v1576 = vpop.f32.mrb[0].mxu0
        %1577 = vdwg.mxu0
        %v1578 = vld [vmem:[#allocation2] sm:$0xff]
        %v1579 = vld [vmem:[#allocation2 + $0x8] sm:$0xff]
        %v1580 = vadd.f32 %v1572, %v1578
        %v1581 = vadd.f32 %v1575, %v1579
        %vm1582 = vcmp.ge.f32.partialorder %v1580, 0.0
        %vm1583 = vcmp.ge.f32.partialorder %v1581, 0.0
        %v1584 = vmul.f32 %v1580, 0.2
        %v1585 = vmul.f32 %v1581, 0.2
        %v1586 = vsel %vm1582, %v1580, %v1584
        %v1587 = vsel %vm1583, %v1581, %v1585
        %v1588 = vrot.slane %v1586, 7
        %v1589 = vrot.slane %v1587, 7
        %v1590 = vsel %vm368, %v1588, %v1589
        %v1591 = vsel %vm368, %v1589, %v1588
        %v1592 = vmul.f32 %v1591, %v348
        %v1593 = vmul.f32 %v1590, %v349
        %v1594 = vld [vmem:[%s5] sm:$0x3]
        %v1595 = vpack.c.bf16 %v1587, %v1586
        %v1596 = vpack.c.bf16 %v1593, %v1592
        %v1597 = vld [vmem:[#allocation8] sm:$0xff]
        %v1598 = vld [vmem:[#allocation8 + $0x8] sm:$0xff]
        %v1599 = vld [vmem:[#allocation8 + $0x10] sm:$0xff]
        %v1600 = vld [vmem:[#allocation8 + $0x18] sm:$0xff]
        %v1601 = vld [vmem:[#allocation8 + $0x20] sm:$0xff]
        %v1602 = vld [vmem:[#allocation8 + $0x28] sm:$0xff]
        %v1603 = vld [vmem:[#allocation8 + $0x30] sm:$0xff]
        %v1604 = vld [vmem:[#allocation8 + $0x38] sm:$0xff]
        %v1605 = vld [vmem:[#allocation8 + $0x40] sm:$0xff]
        %v1606 = vld [vmem:[#allocation8 + $0x48] sm:$0xff]
        %v1607 = vld [vmem:[#allocation8 + $0x50] sm:$0xff]
        %v1608 = vld [vmem:[#allocation8 + $0x58] sm:$0xff]
        %v1609 = vld [vmem:[#allocation8 + $0x60] sm:$0xff]
        %v1610 = vld [vmem:[#allocation8 + $0x68] sm:$0xff]
        %v1611 = vld [vmem:[#allocation8 + $0x70] sm:$0xff]
        %v1612 = vld [vmem:[#allocation8 + $0x78] sm:$0xff]
        %v1613 = vld [vmem:[#allocation8 + $0x80] sm:$0xff]
        %v1614 = vld [vmem:[#allocation8 + $0x88] sm:$0xff]
        %v1615 = vld [vmem:[#allocation8 + $0x90] sm:$0xff]
        %v1616 = vld [vmem:[#allocation8 + $0x98] sm:$0xff]
        %v1617 = vld [vmem:[#allocation8 + $0xa0] sm:$0xff]
        %v1618 = vld [vmem:[#allocation8 + $0xa8] sm:$0xff]
        %v1619 = vld [vmem:[#allocation8 + $0xb0] sm:$0xff]
        %v1620 = vld [vmem:[#allocation8 + $0xb8] sm:$0xff]
        %v1621 = vld [vmem:[#allocation8 + $0xc0] sm:$0xff]
        %v1622 = vld [vmem:[#allocation8 + $0xc8] sm:$0xff]
        %v1623 = vld [vmem:[#allocation8 + $0xd0] sm:$0xff]
        %v1624 = vld [vmem:[#allocation8 + $0xd8] sm:$0xff]
        %v1625 = vld [vmem:[#allocation8 + $0xe0] sm:$0xff]
        %v1626 = vld [vmem:[#allocation8 + $0xe8] sm:$0xff]
        %v1627 = vld [vmem:[#allocation8 + $0xf0] sm:$0xff]
        %v1628 = vld [vmem:[#allocation8 + $0xf8] sm:$0xff]
        %v1630 = vlaneseq
        %v1631 = vshrl.u32 %v1630, 7
        %v1632 = vsub.s32 0, %v1631
        %v1633 = vrot.slane %v1594, %v1632
        %v1634 = vlaneseq
        %v1635 = vshrl.u32 %v1634, 7
        %v1636 = vsub.s32 1, %v1635
        %v1637 = vrot.slane %v1594, %v1636
        %v1672 = vunpack.c.l.b16 %v1597
        %v1673 = vunpack.c.h.b16 %v1597
        %v1674 = vunpack.c.l.b16 %v1598
        %v1675 = vunpack.c.h.b16 %v1598
        %v1676 = vunpack.c.l.b16 %v1599
        %v1677 = vunpack.c.h.b16 %v1599
        %v1678 = vunpack.c.l.b16 %v1600
        %v1679 = vunpack.c.h.b16 %v1600
        %v1680 = vunpack.c.l.b16 %v1601
        %v1681 = vunpack.c.h.b16 %v1601
        %v1682 = vunpack.c.l.b16 %v1602
        %v1683 = vunpack.c.h.b16 %v1602
        %v1684 = vunpack.c.l.b16 %v1603
        %v1685 = vunpack.c.h.b16 %v1603
        %v1686 = vunpack.c.l.b16 %v1604
        %v1687 = vunpack.c.h.b16 %v1604
        %v1688 = vunpack.c.l.b16 %v1605
        %v1689 = vunpack.c.h.b16 %v1605
        %v1690 = vunpack.c.l.b16 %v1606
        %v1691 = vunpack.c.h.b16 %v1606
        %v1692 = vunpack.c.l.b16 %v1607
        %v1693 = vunpack.c.h.b16 %v1607
        %v1694 = vunpack.c.l.b16 %v1608
        %v1695 = vunpack.c.h.b16 %v1608
        %v1696 = vunpack.c.l.b16 %v1609
        %v1697 = vunpack.c.h.b16 %v1609
        %v1698 = vunpack.c.l.b16 %v1610
        %v1699 = vunpack.c.h.b16 %v1610
        %v1700 = vunpack.c.l.b16 %v1611
        %v1701 = vunpack.c.h.b16 %v1611
        %v1702 = vunpack.c.l.b16 %v1612
        %v1703 = vunpack.c.h.b16 %v1612
        %v1704 = vunpack.c.l.b16 %v1613
        %v1705 = vunpack.c.h.b16 %v1613
        %v1706 = vunpack.c.l.b16 %v1614
        %v1707 = vunpack.c.h.b16 %v1614
        %v1708 = vunpack.c.l.b16 %v1615
        %v1709 = vunpack.c.h.b16 %v1615
        %v1710 = vunpack.c.l.b16 %v1616
        %v1711 = vunpack.c.h.b16 %v1616
        %v1712 = vunpack.c.l.b16 %v1617
        %v1713 = vunpack.c.h.b16 %v1617
        %v1714 = vunpack.c.l.b16 %v1618
        %v1715 = vunpack.c.h.b16 %v1618
        %v1716 = vunpack.c.l.b16 %v1619
        %v1717 = vunpack.c.h.b16 %v1619
        %v1718 = vunpack.c.l.b16 %v1620
        %v1719 = vunpack.c.h.b16 %v1620
        %v1720 = vunpack.c.l.b16 %v1621
        %v1721 = vunpack.c.h.b16 %v1621
        %v1722 = vunpack.c.l.b16 %v1622
        %v1723 = vunpack.c.h.b16 %v1622
        %v1724 = vunpack.c.l.b16 %v1623
        %v1725 = vunpack.c.h.b16 %v1623
        %v1726 = vunpack.c.l.b16 %v1624
        %v1727 = vunpack.c.h.b16 %v1624
        %v1728 = vunpack.c.l.b16 %v1625
        %v1729 = vunpack.c.h.b16 %v1625
        %v1730 = vunpack.c.l.b16 %v1626
        %v1731 = vunpack.c.h.b16 %v1626
        %v1732 = vunpack.c.l.b16 %v1627
        %v1733 = vunpack.c.h.b16 %v1627
        %v1734 = vunpack.c.l.b16 %v1628
        %v1735 = vunpack.c.h.b16 %v1628
        %v1736 = vpack.c.b16 %v1674, %v1672
        %v1737 = vpack.c.b16 %v1675, %v1673
        %v1738 = vpack.c.b16 %v1678, %v1676
        %v1739 = vpack.c.b16 %v1679, %v1677
        %v1740 = vpack.c.b16 %v1682, %v1680
        %v1741 = vpack.c.b16 %v1683, %v1681
        %v1742 = vpack.c.b16 %v1686, %v1684
        %v1743 = vpack.c.b16 %v1687, %v1685
        %v1744 = vpack.c.b16 %v1690, %v1688
        %v1745 = vpack.c.b16 %v1691, %v1689
        %v1746 = vpack.c.b16 %v1694, %v1692
        %v1747 = vpack.c.b16 %v1695, %v1693
        %v1748 = vpack.c.b16 %v1698, %v1696
        %v1749 = vpack.c.b16 %v1699, %v1697
        %v1750 = vpack.c.b16 %v1702, %v1700
        %v1751 = vpack.c.b16 %v1703, %v1701
        %v1752 = vpack.c.b16 %v1706, %v1704
        %v1753 = vpack.c.b16 %v1707, %v1705
        %v1754 = vpack.c.b16 %v1710, %v1708
        %v1755 = vpack.c.b16 %v1711, %v1709
        %v1756 = vpack.c.b16 %v1714, %v1712
        %v1757 = vpack.c.b16 %v1715, %v1713
        %v1758 = vpack.c.b16 %v1718, %v1716
        %v1759 = vpack.c.b16 %v1719, %v1717
        %v1760 = vpack.c.b16 %v1722, %v1720
        %v1761 = vpack.c.b16 %v1723, %v1721
        %v1762 = vpack.c.b16 %v1726, %v1724
        %v1763 = vpack.c.b16 %v1727, %v1725
        %v1764 = vpack.c.b16 %v1730, %v1728
        %v1765 = vpack.c.b16 %v1731, %v1729
        %v1766 = vpack.c.b16 %v1734, %v1732
        %v1767 = vpack.c.b16 %v1735, %v1733
        %1800 = vmatprep.subr.bf16.mxu0 %v1737
        %1801 = vmatpush1.bf16.msra.mxu0 %v1736
        %1802 = vmatprep.subr.bf16.mxu0 %v1739
        %1803 = vmatpush1.bf16.msra.mxu0 %v1738
        %1804 = vmatprep.subr.bf16.mxu0 %v1741
        %1805 = vmatpush1.bf16.msra.mxu0 %v1740
        %1806 = vmatprep.subr.bf16.mxu0 %v1743
        %1807 = vmatpush1.bf16.msra.mxu0 %v1742
        %1808 = vmatprep.subr.bf16.mxu0 %v1745
        %1809 = vmatpush1.bf16.msra.mxu0 %v1744
        %1810 = vmatprep.subr.bf16.mxu0 %v1747
        %1811 = vmatpush1.bf16.msra.mxu0 %v1746
        %1812 = vmatprep.subr.bf16.mxu0 %v1749
        %1813 = vmatpush1.bf16.msra.mxu0 %v1748
        %1814 = vmatprep.subr.bf16.mxu0 %v1751
        %1815 = vmatpush1.bf16.msra.mxu0 %v1750
        %1816 = vmatprep.subr.bf16.mxu0 %v1753
        %1817 = vmatpush1.bf16.msra.mxu0 %v1752
        %1818 = vmatprep.subr.bf16.mxu0 %v1755
        %1819 = vmatpush1.bf16.msra.mxu0 %v1754
        %1820 = vmatprep.subr.bf16.mxu0 %v1757
        %1821 = vmatpush1.bf16.msra.mxu0 %v1756
        %1822 = vmatprep.subr.bf16.mxu0 %v1759
        %1823 = vmatpush1.bf16.msra.mxu0 %v1758
        %1824 = vmatprep.subr.bf16.mxu0 %v1761
        %1825 = vmatpush1.bf16.msra.mxu0 %v1760
        %1826 = vmatprep.subr.bf16.mxu0 %v1763
        %1827 = vmatpush1.bf16.msra.mxu0 %v1762
        %1828 = vmatprep.subr.bf16.mxu0 %v1765
        %1829 = vmatpush1.bf16.msra.mxu0 %v1764
        %1830 = vmatprep.subr.bf16.mxu0 %v1767
        %1831 = vmatpush1.bf16.msra.mxu0 %v1766
        %1832 = vmatprep.mubr.bf16.mxu0 %v1596
        %1833 = vmatmul.mubr.bf16.gmra.mrb[0].mxu0 %v1595
        %v1834 = vpop.f32.mrb[0].mxu0
        %v1835 = vadd.f32 %v1633, %v1834
        %v1836 = vpop.f32.mrb[0].mxu0
        %v1837 = vadd.f32 %v1637, %v1836
        %v1838 = vpop.f32.mrb[0].mxu0
        %v1839 = vadd.f32 %v1633, %v1838
        %v1840 = vpop.f32.mrb[0].mxu0
        %v1841 = vadd.f32 %v1637, %v1840
        %1842 = vdwg.mxu0
        %v1843 = vld [vmem:[#allocation9] sm:$0xff]
        %v1844 = vld [vmem:[#allocation9 + $0x8] sm:$0xff]
        %v1845 = vld [vmem:[#allocation9 + $0x10] sm:$0xff]
        %v1846 = vld [vmem:[#allocation9 + $0x18] sm:$0xff]
        %v1847 = vld [vmem:[#allocation9 + $0x20] sm:$0xff]
        %v1848 = vld [vmem:[#allocation9 + $0x28] sm:$0xff]
        %v1849 = vld [vmem:[#allocation9 + $0x30] sm:$0xff]
        %v1850 = vld [vmem:[#allocation9 + $0x38] sm:$0xff]
        %v1851 = vld [vmem:[#allocation9 + $0x40] sm:$0xff]
        %v1852 = vld [vmem:[#allocation9 + $0x48] sm:$0xff]
        %v1853 = vld [vmem:[#allocation9 + $0x50] sm:$0xff]
        %v1854 = vld [vmem:[#allocation9 + $0x58] sm:$0xff]
        %v1855 = vld [vmem:[#allocation9 + $0x60] sm:$0xff]
        %v1856 = vld [vmem:[#allocation9 + $0x68] sm:$0xff]
        %v1857 = vld [vmem:[#allocation9 + $0x70] sm:$0xff]
        %v1858 = vld [vmem:[#allocation9 + $0x78] sm:$0xff]
        %v1875 = vunpack.c.l.b16 %v1843
        %v1876 = vunpack.c.h.b16 %v1843
        %v1877 = vunpack.c.l.b16 %v1844
        %v1878 = vunpack.c.h.b16 %v1844
        %v1879 = vunpack.c.l.b16 %v1845
        %v1880 = vunpack.c.h.b16 %v1845
        %v1881 = vunpack.c.l.b16 %v1846
        %v1882 = vunpack.c.h.b16 %v1846
        %v1883 = vunpack.c.l.b16 %v1847
        %v1884 = vunpack.c.h.b16 %v1847
        %v1885 = vunpack.c.l.b16 %v1848
        %v1886 = vunpack.c.h.b16 %v1848
        %v1887 = vunpack.c.l.b16 %v1849
        %v1888 = vunpack.c.h.b16 %v1849
        %v1889 = vunpack.c.l.b16 %v1850
        %v1890 = vunpack.c.h.b16 %v1850
        %v1891 = vunpack.c.l.b16 %v1851
        %v1892 = vunpack.c.h.b16 %v1851
        %v1893 = vunpack.c.l.b16 %v1852
        %v1894 = vunpack.c.h.b16 %v1852
        %v1895 = vunpack.c.l.b16 %v1853
        %v1896 = vunpack.c.h.b16 %v1853
        %v1897 = vunpack.c.l.b16 %v1854
        %v1898 = vunpack.c.h.b16 %v1854
        %v1899 = vunpack.c.l.b16 %v1855
        %v1900 = vunpack.c.h.b16 %v1855
        %v1901 = vunpack.c.l.b16 %v1856
        %v1902 = vunpack.c.h.b16 %v1856
        %v1903 = vunpack.c.l.b16 %v1857
        %v1904 = vunpack.c.h.b16 %v1857
        %v1905 = vunpack.c.l.b16 %v1858
        %v1906 = vunpack.c.h.b16 %v1858
        %v1907 = vpack.c.b16 %v1877, %v1875
        %v1908 = vpack.c.b16 %v1878, %v1876
        %v1909 = vpack.c.b16 %v1881, %v1879
        %v1910 = vpack.c.b16 %v1882, %v1880
        %v1911 = vpack.c.b16 %v1885, %v1883
        %v1912 = vpack.c.b16 %v1886, %v1884
        %v1913 = vpack.c.b16 %v1889, %v1887
        %v1914 = vpack.c.b16 %v1890, %v1888
        %v1915 = vpack.c.b16 %v1893, %v1891
        %v1916 = vpack.c.b16 %v1894, %v1892
        %v1917 = vpack.c.b16 %v1897, %v1895
        %v1918 = vpack.c.b16 %v1898, %v1896
        %v1919 = vpack.c.b16 %v1901, %v1899
        %v1920 = vpack.c.b16 %v1902, %v1900
        %v1921 = vpack.c.b16 %v1905, %v1903
        %v1922 = vpack.c.b16 %v1906, %v1904
        %1939 = vmatprep.subr.bf16.mxu0 %v1908
        %1940 = vmatpush1.bf16.msra.mxu0 %v1907
        %1941 = vmatprep.subr.bf16.mxu0 %v1910
        %1942 = vmatpush1.bf16.msra.mxu0 %v1909
        %1943 = vmatprep.subr.bf16.mxu0 %v1912
        %1944 = vmatpush1.bf16.msra.mxu0 %v1911
        %1945 = vmatprep.subr.bf16.mxu0 %v1914
        %1946 = vmatpush1.bf16.msra.mxu0 %v1913
        %1947 = vmatprep.subr.bf16.mxu0 %v1916
        %1948 = vmatpush1.bf16.msra.mxu0 %v1915
        %1949 = vmatprep.subr.bf16.mxu0 %v1918
        %1950 = vmatpush1.bf16.msra.mxu0 %v1917
        %1951 = vmatprep.subr.bf16.mxu0 %v1920
        %1952 = vmatpush1.bf16.msra.mxu0 %v1919
        %1953 = vmatprep.subr.bf16.mxu0 %v1922
        %1954 = vmatpush1.bf16.msra.mxu0 %v1921
        %1955 = vmatprep.subr.bf16.mxu0 0
        %1956 = vmatpush1.bf16.msra.mxu0 0
        %1957 = vmatprep.subr.bf16.mxu0 0
        %1958 = vmatpush1.bf16.msra.mxu0 0
        %1959 = vmatprep.subr.bf16.mxu0 0
        %1960 = vmatpush1.bf16.msra.mxu0 0
        %1961 = vmatprep.subr.bf16.mxu0 0
        %1962 = vmatpush1.bf16.msra.mxu0 0
        %1963 = vmatprep.subr.bf16.mxu0 0
        %1964 = vmatpush1.bf16.msra.mxu0 0
        %1965 = vmatprep.subr.bf16.mxu0 0
        %1966 = vmatpush1.bf16.msra.mxu0 0
        %1967 = vmatprep.subr.bf16.mxu0 0
        %1968 = vmatpush1.bf16.msra.mxu0 0
        %1969 = vmatprep.subr.bf16.mxu0 0
        %1970 = vmatpush1.bf16.msra.mxu0 0
        %1971 = vmatprep.mubr.bf16.mxu0 0
        %1972 = vmatmul.mubr.bf16.gmra.mrb[0].mxu0 %v1595
        %v1973 = vpop.f32.mrb[0].mxu0
        %v1974 = vadd.f32 %v1633, %v1973
        %v1975 = vpop.f32.mrb[0].mxu0
        %v1976 = vadd.f32 %v1637, %v1975
        %v1977 = vpop.f32.mrb[0].mxu0
        %v1978 = vadd.f32 %v1633, %v1977
        %v1979 = vpop.f32.mrb[0].mxu0
        %v1980 = vadd.f32 %v1637, %v1979
        %1981 = vdwg.mxu0
        %1982 = vst [vmem:[%s313] sm:$0xff] %v1835
        %1983 = vst [vmem:[%s313 + $0x8] sm:$0xff] %v1837
        %1984 = vst [vmem:[%s313 + $0x10] sm:$0xff] %v1839
        %1985 = vst [vmem:[%s313 + $0x18] sm:$0xff] %v1841
        %s1986 = scalar_lea.vmem %s313, 32 [#allocation11]
        %1987 = vst [vmem:[%s1986] sm:$0xff] %v1974
        %1988 = vst [vmem:[%s1986 + $0x8] sm:$0xff] %v1976
        %1989 = vst [vmem:[%s1986 + $0x10] sm:$0xff] %v1978
        %1990 = vst [vmem:[%s1986 + $0x18] sm:$0xff] %v1980
        %s1991 = sand.u32 %s164, 1
        %s1992 = scalar_lea.sflag [#allocation5], %s1991
        %s1993 = sand.u32 %s164, 1
        %s1994 = smul.addr %s1993, 64
        %s1995 = scalar_lea.vmem [#allocation11], %s1994
        // Predicated region
        $region61: #{tpu_custom_call.1} parent=43 // pred_check
          %p1996 = pneg %p174
        $region62: #{tpu_custom_call.1} parent=43 // pred_check_branch
          %1998 = sbr.rel (%p1996) target = $region64
        $region63: #{tpu_custom_call.1} parent=43 // pred_region
          #allocation13 [shape = 'u32[6]{0}', space=smem, size = 0x18, scoped, tag = 'DMA stride descriptor']
          %s1999 = smul.u32 2, %s25
          %s2001 = ssub.s32 1024, 1024
          %2002 = vsyncadd %s1992, %s2001
          %s2003 = smul.addr %s1999, 2
          %s2004 = smul.addr %s2003, 128
          %s2005 = scalar_lea.hbm %s6, %s2004
          %s2007 = sshll.u32 1, 14
          %s2008 = sxor.u32 4294967295, %s2007
          %s2011 = sshll.u32 7, 18
          %s2012 = sxor.u32 4294967295, %s2011
          %s2013 = sand.u32 0, %s2012
          %s2015 = sor.u32 %s2013, 0
          %s2017 = sshll.u32 3, 24
          %s2018 = sxor.u32 4294967295, %s2017
          %s2019 = sand.u32 %s2015, %s2018
          %s2021 = sor.u32 %s2019, 0
          %s2022 = sshll.u32 %s1995, 4
          %s2023 = int_to_ptr.vmem [resolvable:$true] %s2022
          %2029 = sst [smem:[#allocation13]] 512
          %s2030 = scalar_lea.smem [#allocation13], 1
          %2031 = sst [smem:[%s2030]] 1024
          %s2032 = scalar_lea.smem [#allocation13], 2
          %2033 = sst [smem:[%s2032]] 2
          %s2034 = scalar_lea.smem [#allocation13], 3
          %2035 = sst [smem:[%s2034]] 256
          %s2036 = scalar_lea.smem [#allocation13], 4
          %2037 = sst [smem:[%s2036]] 256
          %s2038 = scalar_lea.smem [#allocation13], 5
          %2039 = sst [smem:[%s2038]] 16
          %2041 = dma.general %s2023, 1024, %s2005, %s1992, [#allocation12], [#allocation13], %s2021, 0
        $region64: #{tpu_custom_call.1} parent=43 // pred_fallthru
          _
      $region44: #{tpu_custom_call.1} parent=5 // pred_fallthru
        _
      %p2042 = scmp.le.s32.totalorder 2, %s20
      // Predicated region
      $region65: #{tpu_custom_call.1} parent=5 // pred_check
        %p2043 = pneg %p2042
      $region66: #{tpu_custom_call.1} parent=5 // pred_check_branch
        %2045 = sbr.rel (%p2043) target = $region68
      $region67: #{tpu_custom_call.1} parent=5 // pred_region
        %s2046 = ssub.s32 %s20, 2
        // Predicated region
        $region69: #{tpu_custom_call.1} parent=67 // pred_check
          %p2047 = pneg %p180
        $region70: #{tpu_custom_call.1} parent=67 // pred_check_branch
          %2049 = sbr.rel (%p2047) target = $region72
        $region71: #{tpu_custom_call.1} parent=67 // pred_region
          %s2050 = sand.u32 %s165, 1
          %s2051 = scalar_lea.sflag [#allocation5], %s2050
          %s2052 = sand.u32 %s165, 1
          %s2053 = smul.addr %s2052, 64
          %s2054 = scalar_lea.vmem [#allocation11], %s2053
          %2055 = dma.done %s2051, 1024
        $region72: #{tpu_custom_call.1} parent=67 // pred_fallthru
          _
      $region68: #{tpu_custom_call.1} parent=5 // pred_fallthru
        _
    $region6: #{tpu_custom_call.1} parent=1 // loop_footer
      %s24 = sadd.s32 1, %s20
    $region7: #{tpu_custom_call.1} parent=1 // loop_footer_branch
      %19 = sbr.rel target = $region3
    $region8: #{tpu_custom_call.1} parent=1 // loop_exit
      _
    %2056 = vsyncpa [#allocation4], 1
    %s2057 = scalar_lea.sflag [#allocation4], 1
    %2058 = vsyncpa %s2057, 1
    %2059 = vsyncpa [#allocation7], 1
    %2060 = vsyncpa [#allocation10], 1
    %2061 = vsyncpa [#allocation5], 1
    %s2062 = scalar_lea.sflag [#allocation5], 1
    %2063 = vsyncpa %s2062, 1

</llo_original>
